<compile_context>
chip_gen: v7x
topology: tpu7x:2x2x1
jax: 0.10.0
libtpu: 0.0.40
codegen_flags: <defaults>
</compile_context>

<pallas_src>
import functools

import jax
import jax.numpy as jnp
from jax import lax
from jax.experimental import pallas as pl
from jax.experimental.pallas import tpu as pltpu

Z_DIM = 64


def _round_up(x, m):
    return ((x + m - 1) // m) * m


# ----------------------------------------------------------------------------
# Pallas kernel: (TM, K) @ (K, N) + bias [+ ReLU]  — bf16 in, f32 accumulate
# ----------------------------------------------------------------------------
def _mm_bias_act_kernel(x_ref, w_ref, b_ref, o_ref, *, activation):
    y = jnp.dot(x_ref[...], w_ref[...], preferred_element_type=jnp.float32)
    y = y + b_ref[...]
    if activation == "relu":
        y = jnp.maximum(y, 0.0)
    o_ref[...] = y


def matmul_bias_act(x, w, b, activation=None, tm_max=512):
    """Row-tiled fused matmul+bias(+ReLU). x:(M,K) f32/bf16, w:(K,N) bf16, b:(N,) f32."""
    M, K = x.shape
    K2, Nout = w.shape
    assert K == K2

    # Row tile: big tiles amortize per-step overhead; pad M so the tile divides it.
    TM = tm_max if M >= tm_max else _round_up(M, 8)
    M_pad = _round_up(M, TM)

    xb = x.astype(jnp.bfloat16)
    if M_pad != M:
        xb = jnp.pad(xb, ((0, M_pad - M), (0, 0)))

    out = pl.pallas_call(
        functools.partial(_mm_bias_act_kernel, activation=activation),
        out_shape=jax.ShapeDtypeStruct((M_pad, Nout), jnp.float32),
        grid=(M_pad // TM,),
        in_specs=[
            pl.BlockSpec((TM, K), lambda i: (i, 0)),      # row tile, pipelined
            pl.BlockSpec((K, Nout), lambda i: (0, 0)),    # weight stays resident
            pl.BlockSpec((1, Nout), lambda i: (0, 0)),    # bias stays resident
        ],
        out_specs=pl.BlockSpec((TM, Nout), lambda i: (i, 0)),
        compiler_params=pltpu.CompilerParams(
            dimension_semantics=("parallel",),            # megacore split on v7x
            vmem_limit_bytes=32 * 1024 * 1024,
        ),
    )(xb, w.astype(jnp.bfloat16), b.reshape(1, Nout).astype(jnp.float32))

    return out[:M] if M_pad != M else out


# ----------------------------------------------------------------------------
# Glue: channels-last im2col for a stride-2 conv (tiny tensors here)
# ----------------------------------------------------------------------------
def im2col_nhwc(x, K, stride, padding):
    """x: (N,H,W,C) -> patches (N*OH*OW, K*K*C) with feature order (kh, kw, c)."""
    N, H, W, C = x.shape
    OH = (H + 2 * padding - K) // stride + 1
    OW = (W + 2 * padding - K) // stride + 1
    xp = jnp.pad(x, ((0, 0), (padding, padding), (padding, padding), (0, 0)))
    cols = [
        xp[:, kh:kh + stride * (OH - 1) + 1:stride,
              kw:kw + stride * (OW - 1) + 1:stride, :]
        for kh in range(K) for kw in range(K)
    ]
    patches = jnp.concatenate(cols, axis=-1)              # (N, OH, OW, K*K*C)
    return patches.reshape(N * OH * OW, K * K * C), OH, OW


# ----------------------------------------------------------------------------
# Parameters (deterministic synthetic init, PyTorch layouts) + kernel prep
# ----------------------------------------------------------------------------
def init_params(key):
    ks = jax.random.split(key, 8)
    n = lambda k, s, sc=0.05: sc * jax.random.normal(k, s, jnp.float32)
    return {
        # Conv2d weights in PyTorch (Cout, Cin, K, K) layout
        "w1": n(ks[0], (32, 1, 4, 4)), "b1": n(ks[1], (32,)),
        "w2": n(ks[2], (64, 32, 4, 4)), "b2": n(ks[3], (64,)),
        # Linear weights stored as (in=64*7*7, out); input index order is the
        # PyTorch Flatten order (c, h, w)
        "fc_mu_w": n(ks[4], (64 * 7 * 7, Z_DIM)), "fc_mu_b": n(ks[5], (Z_DIM,)),
        "fc_logvar_w": n(ks[6], (64 * 7 * 7, Z_DIM)), "fc_logvar_b": n(ks[7], (Z_DIM,)),
    }


def prepare_params(p):
    """One-time repack of PyTorch-layout params into matmul-ready (bf16) matrices."""
    def conv_wmat(w):  # (Cout, Cin, K, K) -> (K*K*Cin, Cout), row order (kh, kw, ci)
        Cout, Cin, KH, KW = w.shape
        return w.transpose(2, 3, 1, 0).reshape(KH * KW * Cin, Cout)

    def fc_perm(w):  # rows in (c,h,w) order -> (h,w,c) order (channels-last flatten)
        return w.reshape(64, 7, 7, -1).transpose(1, 2, 0, 3).reshape(64 * 7 * 7, -1)

    # Concatenate the two heads -> one lane-dense (3136, 128) matmul.
    fc_w = jnp.concatenate([fc_perm(p["fc_mu_w"]), fc_perm(p["fc_logvar_w"])], axis=1)
    fc_b = jnp.concatenate([p["fc_mu_b"], p["fc_logvar_b"]])
    return {
        "w1": conv_wmat(p["w1"]).astype(jnp.bfloat16), "b1": p["b1"],
        "w2": conv_wmat(p["w2"]).astype(jnp.bfloat16), "b2": p["b2"],
        "fc_w": fc_w.astype(jnp.bfloat16), "fc_b": fc_b,
    }


# ----------------------------------------------------------------------------
# Forward pass (mirrors ConvEncoder.forward):
#   Conv2d(1,32,4,s2,p1) -> ReLU -> Conv2d(32,64,4,s2,p1) -> ReLU -> Flatten
#   -> (fc_mu, fc_logvar)
# ----------------------------------------------------------------------------
@jax.jit
def conv_encoder_forward(kp, x_nchw):
    N = x_nchw.shape[0]
    x = x_nchw.transpose(0, 2, 3, 1)                       # single layout change -> NHWC

    p1, OH1, OW1 = im2col_nhwc(x, 4, 2, 1)                 # (N*14*14, 16)
    h1 = matmul_bias_act(p1, kp["w1"], kp["b1"], activation="relu")
    h1 = h1.reshape(N, OH1, OW1, 32)                       # stays channels-last

    p2, OH2, OW2 = im2col_nhwc(h1, 4, 2, 1)                # (N*7*7, 512)
    h2 = matmul_bias_act(p2, kp["w2"], kp["b2"], activation="relu")
    h2 = h2.reshape(N, OH2, OW2, 64)

    x_flat = h2.reshape(N, OH2 * OW2 * 64)                 # (h,w,c) flatten (weights permuted to match)
    out = matmul_bias_act(x_flat, kp["fc_w"], kp["fc_b"], activation=None)  # (N, 128) lane-dense
    return out[:, :Z_DIM], out[:, Z_DIM:]                  # (mu, logvar)


# ----------------------------------------------------------------------------
# Pure-JAX f32 reference (PyTorch semantics, NCHW / (c,h,w) flatten)
# ----------------------------------------------------------------------------
def conv_encoder_reference(p, x):
    y = lax.conv_general_dilated(x, p["w1"], (2, 2), [(1, 1), (1, 1)],
                                 dimension_numbers=("NCHW", "OIHW", "NCHW"))
    y = jnp.maximum(y + p["b1"].reshape(1, -1, 1, 1), 0.0)
    y = lax.conv_general_dilated(y, p["w2"], (2, 2), [(1, 1), (1, 1)],
                                 dimension_numbers=("NCHW", "OIHW", "NCHW"))
    y = jnp.maximum(y + p["b2"].reshape(1, -1, 1, 1), 0.0)
    yf = y.reshape(y.shape[0], -1)                         # PyTorch Flatten (c,h,w)
    mu = yf @ p["fc_mu_w"] + p["fc_mu_b"]
    logvar = yf @ p["fc_logvar_w"] + p["fc_logvar_b"]
    return mu, logvar


if __name__ == "__main__":
    key = jax.random.PRNGKey(0)
    pkey, xkey = jax.random.split(key)
    params = init_params(pkey)
    kparams = prepare_params(params)

    batch = 2
    x = jax.random.normal(xkey, (batch, 1, 28, 28), jnp.float32)

    mu, logvar = conv_encoder_forward(kparams, x)
    mu, logvar = jax.block_until_ready((mu, logvar))

    assert mu.shape == (batch, Z_DIM), mu.shape
    assert logvar.shape == (batch, Z_DIM), logvar.shape
    assert bool(jnp.all(jnp.isfinite(mu))) and bool(jnp.all(jnp.isfinite(logvar)))

    mu_ref, logvar_ref = conv_encoder_reference(params, x)
    max_err = max(float(jnp.max(jnp.abs(mu - mu_ref))),
                  float(jnp.max(jnp.abs(logvar - logvar_ref))))
    # bf16 matmul inputs with f32 accumulation -> expected max err ~a few 1e-3
    assert max_err < 2e-2, f"mismatch vs reference: {max_err}"

    print("KERNEL_OK")
</pallas_src>

<mosaic_0001>
module attributes {stable_mosaic.version = 11 : i64} {
  func.func @_mm_bias_act_kernel(%arg0: i32, %arg1: memref<392x16xbf16, #tpu.memory_space<vmem>>, %arg2: memref<16x32xbf16, #tpu.memory_space<vmem>>, %arg3: memref<1x32xf32, #tpu.memory_space<vmem>>, %arg4: memref<392x32xf32, #tpu.memory_space<vmem>>) attributes {dimension_semantics = [#tpu.dimension_semantics<parallel>], iteration_bounds = array<i64: 1>, scalar_prefetch = 0 : i64, scratch_operands = 0 : i64, tpu.core_type = #tpu.core_type<tc>, window_params = [{transform_indices = @transform_0, window_bounds = array<i64: 392, 16>}, {pipeline_mode = #tpu.pipeline_mode<synchronous>, transform_indices = @transform_1, window_bounds = array<i64: 16, 32>}, {pipeline_mode = #tpu.pipeline_mode<synchronous>, transform_indices = @transform_2, window_bounds = array<i64: 1, 32>}, {transform_indices = @transform_3, window_bounds = array<i64: 392, 32>}]} {
    %c0 = arith.constant 0 : index
    %c0_0 = arith.constant 0 : index
    %0 = vector.load %arg1[%c0, %c0_0] : memref<392x16xbf16, #tpu.memory_space<vmem>>, vector<392x16xbf16>
    %c0_1 = arith.constant 0 : index
    %c0_2 = arith.constant 0 : index
    %1 = vector.load %arg2[%c0_1, %c0_2] : memref<16x32xbf16, #tpu.memory_space<vmem>>, vector<16x32xbf16>
    %cst = arith.constant dense<0.000000e+00> : vector<392x32xf32>
    %2 = tpu.matmul %0, %1, %cst {dimension_numbers = #tpu.dot_dimension_numbers<[1], [0], [0], [1], [0, 0, 1, 1], [], []>} : vector<392x16xbf16>, vector<16x32xbf16>, vector<392x32xf32> -> vector<392x32xf32>
    %c0_3 = arith.constant 0 : index
    %c0_4 = arith.constant 0 : index
    %3 = vector.load %arg3[%c0_3, %c0_4] : memref<1x32xf32, #tpu.memory_space<vmem>>, vector<1x32xf32>
    %4 = vector.broadcast %3 : vector<1x32xf32> to vector<392x32xf32>
    %5 = arith.addf %2, %4 : vector<392x32xf32>
    %cst_5 = arith.constant 0.000000e+00 : f32
    %6 = vector.broadcast %cst_5 : f32 to vector<392x32xf32>
    %7 = arith.maximumf %5, %6 : vector<392x32xf32>
    %c0_6 = arith.constant 0 : index
    %c0_7 = arith.constant 0 : index
    %8 = vector.load %arg4[%c0_6, %c0_7] : memref<392x32xf32, #tpu.memory_space<vmem>>, vector<392x32xf32>
    tpu.vector_store %arg4[%c0_6, %c0_7], %7 {strides = array<i32>} : memref<392x32xf32, #tpu.memory_space<vmem>>, vector<392x32xf32>,
    return
  }
  func.func @transform_0(%arg0: i32) -> (i32, i32) {
    %c0_i32 = arith.constant 0 : i32
    %c0_i32_0 = arith.constant 0 : i32
    return %arg0, %c0_i32 : i32, i32
  }
  func.func @transform_1(%arg0: i32) -> (i32, i32) {
    %c0_i32 = arith.constant 0 : i32
    %c0_i32_0 = arith.constant 0 : i32
    %c0_i32_1 = arith.constant 0 : i32
    return %c0_i32, %c0_i32_0 : i32, i32
  }
  func.func @transform_2(%arg0: i32) -> (i32, i32) {
    %c0_i32 = arith.constant 0 : i32
    %c0_i32_0 = arith.constant 0 : i32
    %c0_i32_1 = arith.constant 0 : i32
    return %c0_i32, %c0_i32_0 : i32, i32
  }
  func.func @transform_3(%arg0: i32) -> (i32, i32) {
    %c0_i32 = arith.constant 0 : i32
    %c0_i32_0 = arith.constant 0 : i32
    return %arg0, %c0_i32 : i32, i32
  }
}

module attributes {stable_mosaic.version = 11 : i64} {
  func.func @_mm_bias_act_kernel(%arg0: i32, %arg1: memref<104x512xbf16, #tpu.memory_space<vmem>>, %arg2: memref<512x64xbf16, #tpu.memory_space<vmem>>, %arg3: memref<1x64xf32, #tpu.memory_space<vmem>>, %arg4: memref<104x64xf32, #tpu.memory_space<vmem>>) attributes {dimension_semantics = [#tpu.dimension_semantics<parallel>], iteration_bounds = array<i64: 1>, scalar_prefetch = 0 : i64, scratch_operands = 0 : i64, tpu.core_type = #tpu.core_type<tc>, window_params = [{transform_indices = @transform_0, window_bounds = array<i64: 104, 512>}, {pipeline_mode = #tpu.pipeline_mode<synchronous>, transform_indices = @transform_1, window_bounds = array<i64: 512, 64>}, {pipeline_mode = #tpu.pipeline_mode<synchronous>, transform_indices = @transform_2, window_bounds = array<i64: 1, 64>}, {transform_indices = @transform_3, window_bounds = array<i64: 104, 64>}]} {
    %c0 = arith.constant 0 : index
    %c0_0 = arith.constant 0 : index
    %0 = vector.load %arg1[%c0, %c0_0] : memref<104x512xbf16, #tpu.memory_space<vmem>>, vector<104x512xbf16>
    %c0_1 = arith.constant 0 : index
    %c0_2 = arith.constant 0 : index
    %1 = vector.load %arg2[%c0_1, %c0_2] : memref<512x64xbf16, #tpu.memory_space<vmem>>, vector<512x64xbf16>
    %cst = arith.constant dense<0.000000e+00> : vector<104x64xf32>
    %2 = tpu.matmul %0, %1, %cst {dimension_numbers = #tpu.dot_dimension_numbers<[1], [0], [0], [1], [0, 0, 1, 1], [], []>} : vector<104x512xbf16>, vector<512x64xbf16>, vector<104x64xf32> -> vector<104x64xf32>
    %c0_3 = arith.constant 0 : index
    %c0_4 = arith.constant 0 : index
    %3 = vector.load %arg3[%c0_3, %c0_4] : memref<1x64xf32, #tpu.memory_space<vmem>>, vector<1x64xf32>
    %4 = vector.broadcast %3 : vector<1x64xf32> to vector<104x64xf32>
    %5 = arith.addf %2, %4 : vector<104x64xf32>
    %cst_5 = arith.constant 0.000000e+00 : f32
    %6 = vector.broadcast %cst_5 : f32 to vector<104x64xf32>
    %7 = arith.maximumf %5, %6 : vector<104x64xf32>
    %c0_6 = arith.constant 0 : index
    %c0_7 = arith.constant 0 : index
    %8 = vector.load %arg4[%c0_6, %c0_7] : memref<104x64xf32, #tpu.memory_space<vmem>>, vector<104x64xf32>
    tpu.vector_store %arg4[%c0_6, %c0_7], %7 {strides = array<i32>} : memref<104x64xf32, #tpu.memory_space<vmem>>, vector<104x64xf32>,
    return
  }
  func.func @transform_0(%arg0: i32) -> (i32, i32) {
    %c0_i32 = arith.constant 0 : i32
    %c0_i32_0 = arith.constant 0 : i32
    return %arg0, %c0_i32 : i32, i32
  }
  func.func @transform_1(%arg0: i32) -> (i32, i32) {
    %c0_i32 = arith.constant 0 : i32
    %c0_i32_0 = arith.constant 0 : i32
    %c0_i32_1 = arith.constant 0 : i32
    return %c0_i32, %c0_i32_0 : i32, i32
  }
  func.func @transform_2(%arg0: i32) -> (i32, i32) {
    %c0_i32 = arith.constant 0 : i32
    %c0_i32_0 = arith.constant 0 : i32
    %c0_i32_1 = arith.constant 0 : i32
    return %c0_i32, %c0_i32_0 : i32, i32
  }
  func.func @transform_3(%arg0: i32) -> (i32, i32) {
    %c0_i32 = arith.constant 0 : i32
    %c0_i32_0 = arith.constant 0 : i32
    return %arg0, %c0_i32 : i32, i32
  }
}

module attributes {stable_mosaic.version = 11 : i64} {
  func.func @_mm_bias_act_kernel(%arg0: i32, %arg1: memref<8x3136xbf16, #tpu.memory_space<vmem>>, %arg2: memref<3136x128xbf16, #tpu.memory_space<vmem>>, %arg3: memref<1x128xf32, #tpu.memory_space<vmem>>, %arg4: memref<8x128xf32, #tpu.memory_space<vmem>>) attributes {dimension_semantics = [#tpu.dimension_semantics<parallel>], iteration_bounds = array<i64: 1>, scalar_prefetch = 0 : i64, scratch_operands = 0 : i64, tpu.core_type = #tpu.core_type<tc>, window_params = [{transform_indices = @transform_0, window_bounds = array<i64: 8, 3136>}, {pipeline_mode = #tpu.pipeline_mode<synchronous>, transform_indices = @transform_1, window_bounds = array<i64: 3136, 128>}, {pipeline_mode = #tpu.pipeline_mode<synchronous>, transform_indices = @transform_2, window_bounds = array<i64: 1, 128>}, {transform_indices = @transform_3, window_bounds = array<i64: 8, 128>}]} {
    %c0 = arith.constant 0 : index
    %c0_0 = arith.constant 0 : index
    %0 = vector.load %arg1[%c0, %c0_0] : memref<8x3136xbf16, #tpu.memory_space<vmem>>, vector<8x3136xbf16>
    %c0_1 = arith.constant 0 : index
    %c0_2 = arith.constant 0 : index
    %1 = vector.load %arg2[%c0_1, %c0_2] : memref<3136x128xbf16, #tpu.memory_space<vmem>>, vector<3136x128xbf16>
    %cst = arith.constant dense<0.000000e+00> : vector<8x128xf32>
    %2 = tpu.matmul %0, %1, %cst {dimension_numbers = #tpu.dot_dimension_numbers<[1], [0], [0], [1], [0, 0, 1, 1], [], []>} : vector<8x3136xbf16>, vector<3136x128xbf16>, vector<8x128xf32> -> vector<8x128xf32>
    %c0_3 = arith.constant 0 : index
    %c0_4 = arith.constant 0 : index
    %3 = vector.load %arg3[%c0_3, %c0_4] : memref<1x128xf32, #tpu.memory_space<vmem>>, vector<1x128xf32>
    %4 = vector.broadcast %3 : vector<1x128xf32> to vector<8x128xf32>
    %5 = arith.addf %2, %4 : vector<8x128xf32>
    %c0_5 = arith.constant 0 : index
    %c0_6 = arith.constant 0 : index
    %6 = vector.load %arg4[%c0_5, %c0_6] : memref<8x128xf32, #tpu.memory_space<vmem>>, vector<8x128xf32>
    tpu.vector_store %arg4[%c0_5, %c0_6], %5 {strides = array<i32>} : memref<8x128xf32, #tpu.memory_space<vmem>>, vector<8x128xf32>,
    return
  }
  func.func @transform_0(%arg0: i32) -> (i32, i32) {
    %c0_i32 = arith.constant 0 : i32
    %c0_i32_0 = arith.constant 0 : i32
    return %arg0, %c0_i32 : i32, i32
  }
  func.func @transform_1(%arg0: i32) -> (i32, i32) {
    %c0_i32 = arith.constant 0 : i32
    %c0_i32_0 = arith.constant 0 : i32
    %c0_i32_1 = arith.constant 0 : i32
    return %c0_i32, %c0_i32_0 : i32, i32
  }
  func.func @transform_2(%arg0: i32) -> (i32, i32) {
    %c0_i32 = arith.constant 0 : i32
    %c0_i32_0 = arith.constant 0 : i32
    %c0_i32_1 = arith.constant 0 : i32
    return %c0_i32, %c0_i32_0 : i32, i32
  }
  func.func @transform_3(%arg0: i32) -> (i32, i32) {
    %c0_i32 = arith.constant 0 : i32
    %c0_i32_0 = arith.constant 0 : i32
    return %arg0, %c0_i32 : i32, i32
  }
}

</mosaic_0001>

<llo_original>
// kernel: conv_encoder_forward.3
$region0: #{conv_encoder_forward.3}
  #allocation0 [shape = 'u32[]', space=smem, size = 0x4, offset = 0x4, fixed_abs, tag = 'smem constant byte address 0x4 - core index']
  #allocation1 [shape = 'u32[144,128]{1,0:T(1,128)}', space=vmem, size = 0x12000, scoped, tag = 'internal scratch']
  %s0 = inlined_call_operand.vmem [shape: bf16[392,16], index: 0, kind: input, shape index: {}]
  %s1 = inlined_call_operand.vmem [shape: bf16[16,32], index: 1, kind: input, shape index: {}]
  %s2 = inlined_call_operand.vmem [shape: f32[1,32], index: 2, kind: input, shape index: {}]
  %s3 = inlined_call_operand.vmem [shape: f32[392,32], index: 3, kind: output, shape index: {}]
  %s4 = sld [smem:[#allocation0]]
  $region22: #{conv_encoder_forward.3} parent=0
    _
  %s6 = ssub.s32 1, %s4
  %s7 = scalar_select 0, %s6, %s4
  // Predicated region
  $region2: #{conv_encoder_forward.3} parent=0 // pred_check
    _
  $region3: #{conv_encoder_forward.3} parent=0 // pred_check_branch
    %9 = sbr.rel (0) target = $region5
  $region4: #{conv_encoder_forward.3} parent=0 // pred_region
    _
  $region5: #{conv_encoder_forward.3} parent=0 // pred_fallthru
    _
  // Predicated region
  $region6: #{conv_encoder_forward.3} parent=0 // pred_check
    _
  $region7: #{conv_encoder_forward.3} parent=0 // pred_check_branch
    %11 = sbr.rel (0) target = $region9
  $region8: #{conv_encoder_forward.3} parent=0 // pred_region
    _
  $region9: #{conv_encoder_forward.3} parent=0 // pred_fallthru
    _
  // Predicated region
  $region10: #{conv_encoder_forward.3} parent=0 // pred_check
    _
  $region11: #{conv_encoder_forward.3} parent=0 // pred_check_branch
    %13 = sbr.rel (0) target = $region13
  $region12: #{conv_encoder_forward.3} parent=0 // pred_region
    _
  $region13: #{conv_encoder_forward.3} parent=0 // pred_fallthru
    _
  %v15 = vld [vmem:[%s0] sm:$0xf]
  %v16 = vld [vmem:[%s0 + $0x4] sm:$0xf]
  %v17 = vld [vmem:[%s0 + $0x8] sm:$0xf]
  %v18 = vld [vmem:[%s0 + $0xc] sm:$0xf]
  %v19 = vld [vmem:[%s0 + $0x10] sm:$0xf]
  %v20 = vld [vmem:[%s0 + $0x14] sm:$0xf]
  %v21 = vld [vmem:[%s0 + $0x18] sm:$0xf]
  %v22 = vld [vmem:[%s0 + $0x1c] sm:$0xf]
  %v23 = vld [vmem:[%s0 + $0x20] sm:$0xf]
  %v24 = vld [vmem:[%s0 + $0x24] sm:$0xf]
  %v25 = vld [vmem:[%s0 + $0x28] sm:$0xf]
  %v26 = vld [vmem:[%s0 + $0x2c] sm:$0xf]
  %v27 = vld [vmem:[%s0 + $0x30] sm:$0xf]
  %v28 = vld [vmem:[%s0 + $0x34] sm:$0xf]
  %v29 = vld [vmem:[%s0 + $0x38] sm:$0xf]
  %v30 = vld [vmem:[%s0 + $0x3c] sm:$0xf]
  %v31 = vld [vmem:[%s0 + $0x40] sm:$0xf]
  %v32 = vld [vmem:[%s0 + $0x44] sm:$0xf]
  %v33 = vld [vmem:[%s0 + $0x48] sm:$0xf]
  %v34 = vld [vmem:[%s0 + $0x4c] sm:$0xf]
  %v35 = vld [vmem:[%s0 + $0x50] sm:$0xf]
  %v36 = vld [vmem:[%s0 + $0x54] sm:$0xf]
  %v37 = vld [vmem:[%s0 + $0x58] sm:$0xf]
  %v38 = vld [vmem:[%s0 + $0x5c] sm:$0xf]
  %v39 = vld [vmem:[%s0 + $0x60] sm:$0xf]
  %v40 = vld [vmem:[%s0 + $0x64] sm:$0xf]
  %v41 = vld [vmem:[%s0 + $0x68] sm:$0xf]
  %v42 = vld [vmem:[%s0 + $0x6c] sm:$0xf]
  %v43 = vld [vmem:[%s0 + $0x70] sm:$0xf]
  %v44 = vld [vmem:[%s0 + $0x74] sm:$0xf]
  %v45 = vld [vmem:[%s0 + $0x78] sm:$0xf]
  %v46 = vld [vmem:[%s0 + $0x7c] sm:$0xf]
  %v47 = vld [vmem:[%s0 + $0x80] sm:$0xf]
  %v48 = vld [vmem:[%s0 + $0x84] sm:$0xf]
  %v49 = vld [vmem:[%s0 + $0x88] sm:$0xf]
  %v50 = vld [vmem:[%s0 + $0x8c] sm:$0xf]
  %v51 = vld [vmem:[%s0 + $0x90] sm:$0xf]
  %v52 = vld [vmem:[%s0 + $0x94] sm:$0xf]
  %v53 = vld [vmem:[%s0 + $0x98] sm:$0xf]
  %v54 = vld [vmem:[%s0 + $0x9c] sm:$0xf]
  %v55 = vld [vmem:[%s0 + $0xa0] sm:$0xf]
  %v56 = vld [vmem:[%s0 + $0xa4] sm:$0xf]
  %v57 = vld [vmem:[%s0 + $0xa8] sm:$0xf]
  %v58 = vld [vmem:[%s0 + $0xac] sm:$0xf]
  %v59 = vld [vmem:[%s0 + $0xb0] sm:$0xf]
  %v60 = vld [vmem:[%s0 + $0xb4] sm:$0xf]
  %v61 = vld [vmem:[%s0 + $0xb8] sm:$0xf]
  %v62 = vld [vmem:[%s0 + $0xbc] sm:$0xf]
  %v63 = vld [vmem:[%s0 + $0xc0] sm:$0xf]
  %v64 = vld [vmem:[%s1] sm:$0xf]
  %v65 = vld [vmem:[%s1 + $0x4] sm:$0xf]
  %v66 = vld [vmem:[%s2] sm:$0x1]
  %v68 = vlaneseq
  %v69 = vshrl.u32 %v68, 7
  %v70 = vsub.s32 0, %v69
  %v71 = vrot.slane %v66, %v70
  %v122 = vunpack.c.l.b16 %v15
  %v123 = vunpack.c.l.b16 %v16
  %v124 = vunpack.c.l.b16 %v17
  %v125 = vunpack.c.l.b16 %v18
  %v126 = vunpack.c.l.b16 %v19
  %v127 = vunpack.c.l.b16 %v20
  %v128 = vunpack.c.l.b16 %v21
  %v129 = vunpack.c.l.b16 %v22
  %v130 = vunpack.c.l.b16 %v23
  %v131 = vunpack.c.l.b16 %v24
  %v132 = vunpack.c.l.b16 %v25
  %v133 = vunpack.c.l.b16 %v26
  %v134 = vunpack.c.l.b16 %v27
  %v135 = vunpack.c.l.b16 %v28
  %v136 = vunpack.c.l.b16 %v29
  %v137 = vunpack.c.l.b16 %v30
  %v138 = vunpack.c.l.b16 %v31
  %v139 = vunpack.c.l.b16 %v32
  %v140 = vunpack.c.l.b16 %v33
  %v141 = vunpack.c.l.b16 %v34
  %v142 = vunpack.c.l.b16 %v35
  %v143 = vunpack.c.l.b16 %v36
  %v144 = vunpack.c.l.b16 %v37
  %v145 = vunpack.c.l.b16 %v38
  %v146 = vunpack.c.l.b16 %v39
  %v147 = vunpack.c.l.b16 %v40
  %v148 = vunpack.c.l.b16 %v41
  %v149 = vunpack.c.l.b16 %v42
  %v150 = vunpack.c.l.b16 %v43
  %v151 = vunpack.c.l.b16 %v44
  %v152 = vunpack.c.l.b16 %v45
  %v153 = vunpack.c.l.b16 %v46
  %v154 = vunpack.c.l.b16 %v47
  %v155 = vunpack.c.l.b16 %v48
  %v156 = vunpack.c.l.b16 %v49
  %v157 = vunpack.c.l.b16 %v50
  %v158 = vunpack.c.l.b16 %v51
  %v159 = vunpack.c.l.b16 %v52
  %v160 = vunpack.c.l.b16 %v53
  %v161 = vunpack.c.l.b16 %v54
  %v162 = vunpack.c.l.b16 %v55
  %v163 = vunpack.c.l.b16 %v56
  %v164 = vunpack.c.l.b16 %v57
  %v165 = vunpack.c.l.b16 %v58
  %v166 = vunpack.c.l.b16 %v59
  %v167 = vunpack.c.l.b16 %v60
  %v168 = vunpack.c.l.b16 %v61
  %v169 = vunpack.c.l.b16 %v62
  %v170 = vunpack.c.l.b16 %v63
  %v171 = vpack.c.b16 %v123, %v122
  %v172 = vpack.c.b16 %v125, %v124
  %v173 = vpack.c.b16 %v127, %v126
  %v174 = vpack.c.b16 %v129, %v128
  %v175 = vpack.c.b16 %v131, %v130
  %v176 = vpack.c.b16 %v133, %v132
  %v177 = vpack.c.b16 %v135, %v134
  %v178 = vpack.c.b16 %v137, %v136
  %v179 = vpack.c.b16 %v139, %v138
  %v180 = vpack.c.b16 %v141, %v140
  %v181 = vpack.c.b16 %v143, %v142
  %v182 = vpack.c.b16 %v145, %v144
  %v183 = vpack.c.b16 %v147, %v146
  %v184 = vpack.c.b16 %v149, %v148
  %v185 = vpack.c.b16 %v151, %v150
  %v186 = vpack.c.b16 %v153, %v152
  %v187 = vpack.c.b16 %v155, %v154
  %v188 = vpack.c.b16 %v157, %v156
  %v189 = vpack.c.b16 %v159, %v158
  %v190 = vpack.c.b16 %v161, %v160
  %v191 = vpack.c.b16 %v163, %v162
  %v192 = vpack.c.b16 %v165, %v164
  %v193 = vpack.c.b16 %v167, %v166
  %v194 = vpack.c.b16 %v169, %v168
  %v195 = vpack.c.b16 %v170, %v170
  %v198 = vunpack.c.l.b16 %v64
  %v199 = vunpack.c.l.b16 %v65
  %v200 = vpack.c.b16 %v199, %v198
  %vm202 = vcmask 130048
  %v204 = vsel %vm202, %v171, 0
  %v207 = vsel %vm202, %v172, 0
  %v210 = vsel %vm202, %v173, 0
  %v213 = vsel %vm202, %v174, 0
  %v216 = vsel %vm202, %v175, 0
  %v219 = vsel %vm202, %v176, 0
  %v222 = vsel %vm202, %v177, 0
  %v225 = vsel %vm202, %v178, 0
  %v228 = vsel %vm202, %v179, 0
  %v231 = vsel %vm202, %v180, 0
  %v234 = vsel %vm202, %v181, 0
  %v237 = vsel %vm202, %v182, 0
  %v240 = vsel %vm202, %v183, 0
  %v243 = vsel %vm202, %v184, 0
  %v246 = vsel %vm202, %v185, 0
  %v249 = vsel %vm202, %v186, 0
  %v252 = vsel %vm202, %v187, 0
  %v255 = vsel %vm202, %v188, 0
  %v258 = vsel %vm202, %v189, 0
  %v261 = vsel %vm202, %v190, 0
  %v264 = vsel %vm202, %v191, 0
  %v267 = vsel %vm202, %v192, 0
  %v270 = vsel %vm202, %v193, 0
  %v273 = vsel %vm202, %v194, 0
  %v276 = vsel %vm202, %v195, 0
  %278 = vmatprep.subr.bf16.mxu0 0
  %279 = vmatpush1.bf16.msra.mxu0 %v200
  %280 = vmatprep.subr.bf16.mxu0 0
  %281 = vmatpush1.bf16.msra.mxu0 0
  %282 = vmatprep.subr.bf16.mxu0 0
  %283 = vmatpush1.bf16.msra.mxu0 0
  %284 = vmatprep.subr.bf16.mxu0 0
  %285 = vmatpush1.bf16.msra.mxu0 0
  %286 = vmatprep.subr.bf16.mxu0 0
  %287 = vmatpush1.bf16.msra.mxu0 0
  %288 = vmatprep.subr.bf16.mxu0 0
  %289 = vmatpush1.bf16.msra.mxu0 0
  %290 = vmatprep.subr.bf16.mxu0 0
  %291 = vmatpush1.bf16.msra.mxu0 0
  %292 = vmatprep.subr.bf16.mxu0 0
  %293 = vmatpush1.bf16.msra.mxu0 0
  %294 = vmatprep.subr.bf16.mxu0 0
  %295 = vmatpush1.bf16.msra.mxu0 0
  %296 = vmatprep.subr.bf16.mxu0 0
  %297 = vmatpush1.bf16.msra.mxu0 0
  %298 = vmatprep.subr.bf16.mxu0 0
  %299 = vmatpush1.bf16.msra.mxu0 0
  %300 = vmatprep.subr.bf16.mxu0 0
  %301 = vmatpush1.bf16.msra.mxu0 0
  %302 = vmatprep.subr.bf16.mxu0 0
  %303 = vmatpush1.bf16.msra.mxu0 0
  %304 = vmatprep.subr.bf16.mxu0 0
  %305 = vmatpush1.bf16.msra.mxu0 0
  %306 = vmatprep.subr.bf16.mxu0 0
  %307 = vmatpush1.bf16.msra.mxu0 0
  %308 = vmatprep.subr.bf16.mxu0 0
  %309 = vmatpush1.bf16.msra.mxu0 0
  %310 = vmatprep.mubr.bf16.mxu0 0
  %311 = vmatmul.mubr.bf16.gmra.mrb[0].mxu0 %v204
  %v312 = vpop.f32.mrb[0].mxu0
  %v313 = vadd.f32 %v71, %v312
  %v314 = vpop.f32.mrb[0].mxu0
  %v315 = vpop.f32.mrb[0].mxu0
  %v316 = vadd.f32 %v71, %v315
  %v317 = vpop.f32.mrb[0].mxu0
  %318 = vmatprep.mubr.bf16.mxu0 0
  %319 = vmatmul.mubr.bf16.gmra.mrb[0].mxu0 %v207
  %v320 = vpop.f32.mrb[0].mxu0
  %v321 = vadd.f32 %v71, %v320
  %v322 = vpop.f32.mrb[0].mxu0
  %v323 = vpop.f32.mrb[0].mxu0
  %v324 = vadd.f32 %v71, %v323
  %v325 = vpop.f32.mrb[0].mxu0
  %326 = vmatprep.mubr.bf16.mxu0 0
  %327 = vmatmul.mubr.bf16.gmra.mrb[0].mxu0 %v210
  %v328 = vpop.f32.mrb[0].mxu0
  %v329 = vadd.f32 %v71, %v328
  %v330 = vpop.f32.mrb[0].mxu0
  %v331 = vpop.f32.mrb[0].mxu0
  %v332 = vadd.f32 %v71, %v331
  %v333 = vpop.f32.mrb[0].mxu0
  %334 = vmatprep.mubr.bf16.mxu0 0
  %335 = vmatmul.mubr.bf16.gmra.mrb[0].mxu0 %v213
  %v336 = vpop.f32.mrb[0].mxu0
  %v337 = vadd.f32 %v71, %v336
  %v338 = vpop.f32.mrb[0].mxu0
  %v339 = vpop.f32.mrb[0].mxu0
  %v340 = vadd.f32 %v71, %v339
  %v341 = vpop.f32.mrb[0].mxu0
  %342 = vmatprep.mubr.bf16.mxu0 0
  %343 = vmatmul.mubr.bf16.gmra.mrb[0].mxu0 %v216
  %v344 = vpop.f32.mrb[0].mxu0
  %v345 = vadd.f32 %v71, %v344
  %v346 = vpop.f32.mrb[0].mxu0
  %v347 = vpop.f32.mrb[0].mxu0
  %v348 = vadd.f32 %v71, %v347
  %v349 = vpop.f32.mrb[0].mxu0
  %350 = vmatprep.mubr.bf16.mxu0 0
  %351 = vmatmul.mubr.bf16.gmra.mrb[0].mxu0 %v219
  %v352 = vpop.f32.mrb[0].mxu0
  %v353 = vadd.f32 %v71, %v352
  %v354 = vpop.f32.mrb[0].mxu0
  %v355 = vpop.f32.mrb[0].mxu0
  %v356 = vadd.f32 %v71, %v355
  %v357 = vpop.f32.mrb[0].mxu0
  %358 = vmatprep.mubr.bf16.mxu0 0
  %359 = vmatmul.mubr.bf16.gmra.mrb[0].mxu0 %v222
  %v360 = vpop.f32.mrb[0].mxu0
  %v361 = vadd.f32 %v71, %v360
  %v362 = vpop.f32.mrb[0].mxu0
  %v363 = vpop.f32.mrb[0].mxu0
  %v364 = vadd.f32 %v71, %v363
  %v365 = vpop.f32.mrb[0].mxu0
  %366 = vmatprep.mubr.bf16.mxu0 0
  %367 = vmatmul.mubr.bf16.gmra.mrb[0].mxu0 %v225
  %v368 = vpop.f32.mrb[0].mxu0
  %v369 = vadd.f32 %v71, %v368
  %v370 = vpop.f32.mrb[0].mxu0
  %v371 = vpop.f32.mrb[0].mxu0
  %v372 = vadd.f32 %v71, %v371
  %v373 = vpop.f32.mrb[0].mxu0
  %374 = vmatprep.mubr.bf16.mxu0 0
  %375 = vmatmul.mubr.bf16.gmra.mrb[0].mxu0 %v228
  %v376 = vpop.f32.mrb[0].mxu0
  %v377 = vadd.f32 %v71, %v376
  %v378 = vpop.f32.mrb[0].mxu0
  %v379 = vpop.f32.mrb[0].mxu0
  %v380 = vadd.f32 %v71, %v379
  %v381 = vpop.f32.mrb[0].mxu0
  %382 = vmatprep.mubr.bf16.mxu0 0
  %383 = vmatmul.mubr.bf16.gmra.mrb[0].mxu0 %v231
  %v384 = vpop.f32.mrb[0].mxu0
  %v385 = vadd.f32 %v71, %v384
  %v386 = vpop.f32.mrb[0].mxu0
  %v387 = vpop.f32.mrb[0].mxu0
  %v388 = vadd.f32 %v71, %v387
  %v389 = vpop.f32.mrb[0].mxu0
  %390 = vmatprep.mubr.bf16.mxu0 0
  %391 = vmatmul.mubr.bf16.gmra.mrb[0].mxu0 %v234
  %v392 = vpop.f32.mrb[0].mxu0
  %v393 = vadd.f32 %v71, %v392
  %v394 = vpop.f32.mrb[0].mxu0
  %v395 = vpop.f32.mrb[0].mxu0
  %v396 = vadd.f32 %v71, %v395
  %v397 = vpop.f32.mrb[0].mxu0
  %398 = vmatprep.mubr.bf16.mxu0 0
  %399 = vmatmul.mubr.bf16.gmra.mrb[0].mxu0 %v237
  %v400 = vpop.f32.mrb[0].mxu0
  %v401 = vadd.f32 %v71, %v400
  %v402 = vpop.f32.mrb[0].mxu0
  %v403 = vpop.f32.mrb[0].mxu0
  %v404 = vadd.f32 %v71, %v403
  %v405 = vpop.f32.mrb[0].mxu0
  %406 = vmatprep.mubr.bf16.mxu0 0
  %407 = vmatmul.mubr.bf16.gmra.mrb[0].mxu0 %v240
  %v408 = vpop.f32.mrb[0].mxu0
  %v409 = vadd.f32 %v71, %v408
  %v410 = vpop.f32.mrb[0].mxu0
  %v411 = vpop.f32.mrb[0].mxu0
  %v412 = vadd.f32 %v71, %v411
  %v413 = vpop.f32.mrb[0].mxu0
  %414 = vmatprep.mubr.bf16.mxu0 0
  %415 = vmatmul.mubr.bf16.gmra.mrb[0].mxu0 %v243
  %v416 = vpop.f32.mrb[0].mxu0
  %v417 = vadd.f32 %v71, %v416
  %v418 = vpop.f32.mrb[0].mxu0
  %v419 = vpop.f32.mrb[0].mxu0
  %v420 = vadd.f32 %v71, %v419
  %v421 = vpop.f32.mrb[0].mxu0
  %422 = vmatprep.mubr.bf16.mxu0 0
  %423 = vmatmul.mubr.bf16.gmra.mrb[0].mxu0 %v246
  %v424 = vpop.f32.mrb[0].mxu0
  %v425 = vadd.f32 %v71, %v424
  %v426 = vpop.f32.mrb[0].mxu0
  %v427 = vpop.f32.mrb[0].mxu0
  %v428 = vadd.f32 %v71, %v427
  %v429 = vpop.f32.mrb[0].mxu0
  %430 = vmatprep.mubr.bf16.mxu0 0
  %431 = vmatmul.mubr.bf16.gmra.mrb[0].mxu0 %v249
  %v432 = vpop.f32.mrb[0].mxu0
  %v433 = vadd.f32 %v71, %v432
  %v434 = vpop.f32.mrb[0].mxu0
  %v435 = vpop.f32.mrb[0].mxu0
  %v436 = vadd.f32 %v71, %v435
  %v437 = vpop.f32.mrb[0].mxu0
  %438 = vmatprep.mubr.bf16.mxu0 0
  %439 = vmatmul.mubr.bf16.gmra.mrb[0].mxu0 %v252
  %v440 = vpop.f32.mrb[0].mxu0
  %v441 = vadd.f32 %v71, %v440
  %v442 = vpop.f32.mrb[0].mxu0
  %v443 = vpop.f32.mrb[0].mxu0
  %v444 = vadd.f32 %v71, %v443
  %v445 = vpop.f32.mrb[0].mxu0
  %446 = vmatprep.mubr.bf16.mxu0 0
  %447 = vmatmul.mubr.bf16.gmra.mrb[0].mxu0 %v255
  %v448 = vpop.f32.mrb[0].mxu0
  %v449 = vadd.f32 %v71, %v448
  %v450 = vpop.f32.mrb[0].mxu0
  %v451 = vpop.f32.mrb[0].mxu0
  %v452 = vadd.f32 %v71, %v451
  %v453 = vpop.f32.mrb[0].mxu0
  %454 = vmatprep.mubr.bf16.mxu0 0
  %455 = vmatmul.mubr.bf16.gmra.mrb[0].mxu0 %v258
  %v456 = vpop.f32.mrb[0].mxu0
  %v457 = vadd.f32 %v71, %v456
  %v458 = vpop.f32.mrb[0].mxu0
  %v459 = vpop.f32.mrb[0].mxu0
  %v460 = vadd.f32 %v71, %v459
  %v461 = vpop.f32.mrb[0].mxu0
  %462 = vmatprep.mubr.bf16.mxu0 0
  %463 = vmatmul.mubr.bf16.gmra.mrb[0].mxu0 %v261
  %v464 = vpop.f32.mrb[0].mxu0
  %v465 = vadd.f32 %v71, %v464
  %v466 = vpop.f32.mrb[0].mxu0
  %v467 = vpop.f32.mrb[0].mxu0
  %v468 = vadd.f32 %v71, %v467
  %v469 = vpop.f32.mrb[0].mxu0
  %470 = vmatprep.mubr.bf16.mxu0 0
  %471 = vmatmul.mubr.bf16.gmra.mrb[0].mxu0 %v264
  %v472 = vpop.f32.mrb[0].mxu0
  %v473 = vadd.f32 %v71, %v472
  %v474 = vpop.f32.mrb[0].mxu0
  %v475 = vpop.f32.mrb[0].mxu0
  %v476 = vadd.f32 %v71, %v475
  %v477 = vpop.f32.mrb[0].mxu0
  %478 = vmatprep.mubr.bf16.mxu0 0
  %479 = vmatmul.mubr.bf16.gmra.mrb[0].mxu0 %v267
  %v480 = vpop.f32.mrb[0].mxu0
  %v481 = vadd.f32 %v71, %v480
  %v482 = vpop.f32.mrb[0].mxu0
  %v483 = vpop.f32.mrb[0].mxu0
  %v484 = vadd.f32 %v71, %v483
  %v485 = vpop.f32.mrb[0].mxu0
  %486 = vmatprep.mubr.bf16.mxu0 0
  %487 = vmatmul.mubr.bf16.gmra.mrb[0].mxu0 %v270
  %v488 = vpop.f32.mrb[0].mxu0
  %v489 = vadd.f32 %v71, %v488
  %v490 = vpop.f32.mrb[0].mxu0
  %v491 = vpop.f32.mrb[0].mxu0
  %v492 = vadd.f32 %v71, %v491
  %v493 = vpop.f32.mrb[0].mxu0
  %494 = vmatprep.mubr.bf16.mxu0 0
  %495 = vmatmul.mubr.bf16.gmra.mrb[0].mxu0 %v273
  %v496 = vpop.f32.mrb[0].mxu0
  %v497 = vadd.f32 %v71, %v496
  %v498 = vpop.f32.mrb[0].mxu0
  %v499 = vpop.f32.mrb[0].mxu0
  %v500 = vadd.f32 %v71, %v499
  %v501 = vpop.f32.mrb[0].mxu0
  %502 = vmatprep.mubr.bf16.mxu0 0
  %503 = vmatmul.mubr.bf16.gmra.mrb[0].mxu0 %v276
  %v504 = vpop.f32.mrb[0].mxu0
  %v505 = vadd.f32 %v71, %v504
  %v506 = vpop.f32.mrb[0].mxu0
  %v507 = vpop.f32.mrb[0].mxu0
  %v508 = vpop.f32.mrb[0].mxu0
  %509 = vdwg.mxu0
  %v510 = vmax.f32 %v313, 0.0
  %v511 = vmax.f32 %v316, 0.0
  %v512 = vmax.f32 %v321, 0.0
  %v513 = vmax.f32 %v324, 0.0
  %v514 = vmax.f32 %v329, 0.0
  %v515 = vmax.f32 %v332, 0.0
  %v516 = vmax.f32 %v337, 0.0
  %v517 = vmax.f32 %v340, 0.0
  %v518 = vmax.f32 %v345, 0.0
  %v519 = vmax.f32 %v348, 0.0
  %v520 = vmax.f32 %v353, 0.0
  %v521 = vmax.f32 %v356, 0.0
  %v522 = vmax.f32 %v361, 0.0
  %v523 = vmax.f32 %v364, 0.0
  %v524 = vmax.f32 %v369, 0.0
  %v525 = vmax.f32 %v372, 0.0
  %v526 = vmax.f32 %v377, 0.0
  %v527 = vmax.f32 %v380, 0.0
  %v528 = vmax.f32 %v385, 0.0
  %v529 = vmax.f32 %v388, 0.0
  %v530 = vmax.f32 %v393, 0.0
  %v531 = vmax.f32 %v396, 0.0
  %v532 = vmax.f32 %v401, 0.0
  %v533 = vmax.f32 %v404, 0.0
  %v534 = vmax.f32 %v409, 0.0
  %v535 = vmax.f32 %v412, 0.0
  %v536 = vmax.f32 %v417, 0.0
  %v537 = vmax.f32 %v420, 0.0
  %v538 = vmax.f32 %v425, 0.0
  %v539 = vmax.f32 %v428, 0.0
  %v540 = vmax.f32 %v433, 0.0
  %v541 = vmax.f32 %v436, 0.0
  %v542 = vmax.f32 %v441, 0.0
  %v543 = vmax.f32 %v444, 0.0
  %v544 = vmax.f32 %v449, 0.0
  %v545 = vmax.f32 %v452, 0.0
  %v546 = vmax.f32 %v457, 0.0
  %v547 = vmax.f32 %v460, 0.0
  %v548 = vmax.f32 %v465, 0.0
  %v549 = vmax.f32 %v468, 0.0
  %v550 = vmax.f32 %v473, 0.0
  %v551 = vmax.f32 %v476, 0.0
  %v552 = vmax.f32 %v481, 0.0
  %v553 = vmax.f32 %v484, 0.0
  %v554 = vmax.f32 %v489, 0.0
  %v555 = vmax.f32 %v492, 0.0
  %v556 = vmax.f32 %v497, 0.0
  %v557 = vmax.f32 %v500, 0.0
  %v558 = vmax.f32 %v505, 0.0
  %vm559 = vcmask 261120
  %560 = vst.msk [vmem:[%s3] sm:$0xff] %vm559, %v510
  %561 = vst.msk [vmem:[%s3 + $0x8] sm:$0xff] %vm559, %v511
  %562 = vst.msk [vmem:[%s3 + $0x10] sm:$0xff] %vm559, %v512
  %563 = vst.msk [vmem:[%s3 + $0x18] sm:$0xff] %vm559, %v513
  %564 = vst.msk [vmem:[%s3 + $0x20] sm:$0xff] %vm559, %v514
  %565 = vst.msk [vmem:[%s3 + $0x28] sm:$0xff] %vm559, %v515
  %566 = vst.msk [vmem:[%s3 + $0x30] sm:$0xff] %vm559, %v516
  %567 = vst.msk [vmem:[%s3 + $0x38] sm:$0xff] %vm559, %v517
  %568 = vst.msk [vmem:[%s3 + $0x40] sm:$0xff] %vm559, %v518
  %569 = vst.msk [vmem:[%s3 + $0x48] sm:$0xff] %vm559, %v519
  %570 = vst.msk [vmem:[%s3 + $0x50] sm:$0xff] %vm559, %v520
  %571 = vst.msk [vmem:[%s3 + $0x58] sm:$0xff] %vm559, %v521
  %572 = vst.msk [vmem:[%s3 + $0x60] sm:$0xff] %vm559, %v522
  %573 = vst.msk [vmem:[%s3 + $0x68] sm:$0xff] %vm559, %v523
  %574 = vst.msk [vmem:[%s3 + $0x70] sm:$0xff] %vm559, %v524
  %575 = vst.msk [vmem:[%s3 + $0x78] sm:$0xff] %vm559, %v525
  %576 = vst.msk [vmem:[%s3 + $0x80] sm:$0xff] %vm559, %v526
  %577 = vst.msk [vmem:[%s3 + $0x88] sm:$0xff] %vm559, %v527
  %578 = vst.msk [vmem:[%s3 + $0x90] sm:$0xff] %vm559, %v528
  %579 = vst.msk [vmem:[%s3 + $0x98] sm:$0xff] %vm559, %v529
  %580 = vst.msk [vmem:[%s3 + $0xa0] sm:$0xff] %vm559, %v530
  %581 = vst.msk [vmem:[%s3 + $0xa8] sm:$0xff] %vm559, %v531
  %582 = vst.msk [vmem:[%s3 + $0xb0] sm:$0xff] %vm559, %v532
  %583 = vst.msk [vmem:[%s3 + $0xb8] sm:$0xff] %vm559, %v533
  %584 = vst.msk [vmem:[%s3 + $0xc0] sm:$0xff] %vm559, %v534
  %585 = vst.msk [vmem:[%s3 + $0xc8] sm:$0xff] %vm559, %v535
  %586 = vst.msk [vmem:[%s3 + $0xd0] sm:$0xff] %vm559, %v536
  %587 = vst.msk [vmem:[%s3 + $0xd8] sm:$0xff] %vm559, %v537
  %588 = vst.msk [vmem:[%s3 + $0xe0] sm:$0xff] %vm559, %v538
  %589 = vst.msk [vmem:[%s3 + $0xe8] sm:$0xff] %vm559, %v539
  %590 = vst.msk [vmem:[%s3 + $0xf0] sm:$0xff] %vm559, %v540
  %591 = vst.msk [vmem:[%s3 + $0xf8] sm:$0xff] %vm559, %v541
  %592 = vst.msk [vmem:[%s3 + $0x100] sm:$0xff] %vm559, %v542
  %593 = vst.msk [vmem:[%s3 + $0x108] sm:$0xff] %vm559, %v543
  %594 = vst.msk [vmem:[%s3 + $0x110] sm:$0xff] %vm559, %v544
  %595 = vst.msk [vmem:[%s3 + $0x118] sm:$0xff] %vm559, %v545
  %596 = vst.msk [vmem:[%s3 + $0x120] sm:$0xff] %vm559, %v546
  %597 = vst.msk [vmem:[%s3 + $0x128] sm:$0xff] %vm559, %v547
  %598 = vst.msk [vmem:[%s3 + $0x130] sm:$0xff] %vm559, %v548
  %599 = vst.msk [vmem:[%s3 + $0x138] sm:$0xff] %vm559, %v549
  %600 = vst.msk [vmem:[%s3 + $0x140] sm:$0xff] %vm559, %v550
  %601 = vst.msk [vmem:[%s3 + $0x148] sm:$0xff] %vm559, %v551
  %602 = vst.msk [vmem:[%s3 + $0x150] sm:$0xff] %vm559, %v552
  %603 = vst.msk [vmem:[%s3 + $0x158] sm:$0xff] %vm559, %v553
  %604 = vst.msk [vmem:[%s3 + $0x160] sm:$0xff] %vm559, %v554
  %605 = vst.msk [vmem:[%s3 + $0x168] sm:$0xff] %vm559, %v555
  %606 = vst.msk [vmem:[%s3 + $0x170] sm:$0xff] %vm559, %v556
  %607 = vst.msk [vmem:[%s3 + $0x178] sm:$0xff] %vm559, %v557
  %608 = vst.msk [vmem:[%s3 + $0x180] sm:$0xff] %vm559, %v558
  // Predicated region
  $region14: #{conv_encoder_forward.3} parent=0 // pred_check
    _
  $region15: #{conv_encoder_forward.3} parent=0 // pred_check_branch
    %610 = sbr.rel (0) target = $region17
  $region16: #{conv_encoder_forward.3} parent=0 // pred_region
    _
  $region17: #{conv_encoder_forward.3} parent=0 // pred_fallthru
    _
  // Predicated region
  $region18: #{conv_encoder_forward.3} parent=0 // pred_check
    _
  $region19: #{conv_encoder_forward.3} parent=0 // pred_check_branch
    %612 = sbr.rel (0) target = $region21
  $region20: #{conv_encoder_forward.3} parent=0 // pred_region
    _
  $region21: #{conv_encoder_forward.3} parent=0 // pred_fallthru
    _

// kernel: conv_encoder_forward.4
$region0: #{conv_encoder_forward.4}
  #allocation0 [shape = 'u32[]', space=smem, size = 0x4, offset = 0x4, fixed_abs, tag = 'smem constant byte address 0x4 - core index']
  #allocation1 [shape = 'u32[144,128]{1,0:T(1,128)}', space=vmem, size = 0x12000, scoped, tag = 'internal scratch']
  %s0 = inlined_call_operand.vmem [shape: bf16[104,512], index: 0, kind: input, shape index: {}]
  %s1 = inlined_call_operand.vmem [shape: bf16[512,64], index: 1, kind: input, shape index: {}]
  %s2 = inlined_call_operand.vmem [shape: f32[1,64], index: 2, kind: input, shape index: {}]
  %s3 = inlined_call_operand.vmem [shape: f32[104,64], index: 3, kind: output, shape index: {}]
  %s4 = sld [smem:[#allocation0]]
  $region22: #{conv_encoder_forward.4} parent=0
    _
  %s6 = ssub.s32 1, %s4
  %s7 = scalar_select 0, %s6, %s4
  // Predicated region
  $region2: #{conv_encoder_forward.4} parent=0 // pred_check
    _
  $region3: #{conv_encoder_forward.4} parent=0 // pred_check_branch
    %9 = sbr.rel (0) target = $region5
  $region4: #{conv_encoder_forward.4} parent=0 // pred_region
    _
  $region5: #{conv_encoder_forward.4} parent=0 // pred_fallthru
    _
  // Predicated region
  $region6: #{conv_encoder_forward.4} parent=0 // pred_check
    _
  $region7: #{conv_encoder_forward.4} parent=0 // pred_check_branch
    %11 = sbr.rel (0) target = $region9
  $region8: #{conv_encoder_forward.4} parent=0 // pred_region
    _
  $region9: #{conv_encoder_forward.4} parent=0 // pred_fallthru
    _
  // Predicated region
  $region10: #{conv_encoder_forward.4} parent=0 // pred_check
    _
  $region11: #{conv_encoder_forward.4} parent=0 // pred_check_branch
    %13 = sbr.rel (0) target = $region13
  $region12: #{conv_encoder_forward.4} parent=0 // pred_region
    _
  $region13: #{conv_encoder_forward.4} parent=0 // pred_fallthru
    _
  %v15 = vld [vmem:[%s0] sm:$0xff]
  %v16 = vld [vmem:[%s0 + $0x8] sm:$0xff]
  %v17 = vld [vmem:[%s0 + $0x10] sm:$0xff]
  %v18 = vld [vmem:[%s0 + $0x18] sm:$0xff]
  %v19 = vld [vmem:[%s0 + $0x20] sm:$0xff]
  %v20 = vld [vmem:[%s0 + $0x28] sm:$0xff]
  %v21 = vld [vmem:[%s0 + $0x30] sm:$0xff]
  %v22 = vld [vmem:[%s0 + $0x38] sm:$0xff]
  %v23 = vld [vmem:[%s0 + $0x40] sm:$0xff]
  %v24 = vld [vmem:[%s0 + $0x48] sm:$0xff]
  %v25 = vld [vmem:[%s0 + $0x50] sm:$0xff]
  %v26 = vld [vmem:[%s0 + $0x58] sm:$0xff]
  %v27 = vld [vmem:[%s0 + $0x60] sm:$0xff]
  %v28 = vld [vmem:[%s0 + $0x68] sm:$0xff]
  %v29 = vld [vmem:[%s0 + $0x70] sm:$0xff]
  %v30 = vld [vmem:[%s0 + $0x78] sm:$0xff]
  %v31 = vld [vmem:[%s0 + $0x80] sm:$0xff]
  %v32 = vld [vmem:[%s0 + $0x88] sm:$0xff]
  %v33 = vld [vmem:[%s0 + $0x90] sm:$0xff]
  %v34 = vld [vmem:[%s0 + $0x98] sm:$0xff]
  %v35 = vld [vmem:[%s0 + $0xa0] sm:$0xff]
  %v36 = vld [vmem:[%s0 + $0xa8] sm:$0xff]
  %v37 = vld [vmem:[%s0 + $0xb0] sm:$0xff]
  %v38 = vld [vmem:[%s0 + $0xb8] sm:$0xff]
  %v39 = vld [vmem:[%s0 + $0xc0] sm:$0xff]
  %v40 = vld [vmem:[%s0 + $0xc8] sm:$0xff]
  %v41 = vld [vmem:[%s1] sm:$0xf]
  %v42 = vld [vmem:[%s1 + $0x4] sm:$0xf]
  %v43 = vld [vmem:[%s1 + $0x8] sm:$0xf]
  %v44 = vld [vmem:[%s1 + $0xc] sm:$0xf]
  %v45 = vld [vmem:[%s1 + $0x10] sm:$0xf]
  %v46 = vld [vmem:[%s1 + $0x14] sm:$0xf]
  %v47 = vld [vmem:[%s1 + $0x18] sm:$0xf]
  %v48 = vld [vmem:[%s1 + $0x1c] sm:$0xf]
  %v49 = vld [vmem:[%s1 + $0x20] sm:$0xf]
  %v50 = vld [vmem:[%s1 + $0x24] sm:$0xf]
  %v51 = vld [vmem:[%s1 + $0x28] sm:$0xf]
  %v52 = vld [vmem:[%s1 + $0x2c] sm:$0xf]
  %v53 = vld [vmem:[%s1 + $0x30] sm:$0xf]
  %v54 = vld [vmem:[%s1 + $0x34] sm:$0xf]
  %v55 = vld [vmem:[%s1 + $0x38] sm:$0xf]
  %v56 = vld [vmem:[%s1 + $0x3c] sm:$0xf]
  %v57 = vld [vmem:[%s1 + $0x40] sm:$0xf]
  %v58 = vld [vmem:[%s1 + $0x44] sm:$0xf]
  %v59 = vld [vmem:[%s1 + $0x48] sm:$0xf]
  %v60 = vld [vmem:[%s1 + $0x4c] sm:$0xf]
  %v61 = vld [vmem:[%s1 + $0x50] sm:$0xf]
  %v62 = vld [vmem:[%s1 + $0x54] sm:$0xf]
  %v63 = vld [vmem:[%s1 + $0x58] sm:$0xf]
  %v64 = vld [vmem:[%s1 + $0x5c] sm:$0xf]
  %v65 = vld [vmem:[%s1 + $0x60] sm:$0xf]
  %v66 = vld [vmem:[%s1 + $0x64] sm:$0xf]
  %v67 = vld [vmem:[%s1 + $0x68] sm:$0xf]
  %v68 = vld [vmem:[%s1 + $0x6c] sm:$0xf]
  %v69 = vld [vmem:[%s1 + $0x70] sm:$0xf]
  %v70 = vld [vmem:[%s1 + $0x74] sm:$0xf]
  %v71 = vld [vmem:[%s1 + $0x78] sm:$0xf]
  %v72 = vld [vmem:[%s1 + $0x7c] sm:$0xf]
  %v73 = vld [vmem:[%s1 + $0x80] sm:$0xf]
  %v74 = vld [vmem:[%s1 + $0x84] sm:$0xf]
  %v75 = vld [vmem:[%s1 + $0x88] sm:$0xf]
  %v76 = vld [vmem:[%s1 + $0x8c] sm:$0xf]
  %v77 = vld [vmem:[%s1 + $0x90] sm:$0xf]
  %v78 = vld [vmem:[%s1 + $0x94] sm:$0xf]
  %v79 = vld [vmem:[%s1 + $0x98] sm:$0xf]
  %v80 = vld [vmem:[%s1 + $0x9c] sm:$0xf]
  %v81 = vld [vmem:[%s1 + $0xa0] sm:$0xf]
  %v82 = vld [vmem:[%s1 + $0xa4] sm:$0xf]
  %v83 = vld [vmem:[%s1 + $0xa8] sm:$0xf]
  %v84 = vld [vmem:[%s1 + $0xac] sm:$0xf]
  %v85 = vld [vmem:[%s1 + $0xb0] sm:$0xf]
  %v86 = vld [vmem:[%s1 + $0xb4] sm:$0xf]
  %v87 = vld [vmem:[%s1 + $0xb8] sm:$0xf]
  %v88 = vld [vmem:[%s1 + $0xbc] sm:$0xf]
  %v89 = vld [vmem:[%s1 + $0xc0] sm:$0xf]
  %v90 = vld [vmem:[%s1 + $0xc4] sm:$0xf]
  %v91 = vld [vmem:[%s1 + $0xc8] sm:$0xf]
  %v92 = vld [vmem:[%s1 + $0xcc] sm:$0xf]
  %v93 = vld [vmem:[%s1 + $0xd0] sm:$0xf]
  %v94 = vld [vmem:[%s1 + $0xd4] sm:$0xf]
  %v95 = vld [vmem:[%s1 + $0xd8] sm:$0xf]
  %v96 = vld [vmem:[%s1 + $0xdc] sm:$0xf]
  %v97 = vld [vmem:[%s1 + $0xe0] sm:$0xf]
  %v98 = vld [vmem:[%s1 + $0xe4] sm:$0xf]
  %v99 = vld [vmem:[%s1 + $0xe8] sm:$0xf]
  %v100 = vld [vmem:[%s1 + $0xec] sm:$0xf]
  %v101 = vld [vmem:[%s1 + $0xf0] sm:$0xf]
  %v102 = vld [vmem:[%s1 + $0xf4] sm:$0xf]
  %v103 = vld [vmem:[%s1 + $0xf8] sm:$0xf]
  %v104 = vld [vmem:[%s1 + $0xfc] sm:$0xf]
  %v105 = vld [vmem:[%s2] sm:$0x1]
  %v107 = vlaneseq
  %v108 = vshrl.u32 %v107, 7
  %v109 = vsub.s32 0, %v108
  %v110 = vrot.slane %v105, %v109
  %v138 = vunpack.c.l.b16 %v15
  %v139 = vunpack.c.h.b16 %v15
  %v140 = vunpack.c.l.b16 %v16
  %v141 = vunpack.c.h.b16 %v16
  %v142 = vunpack.c.l.b16 %v17
  %v143 = vunpack.c.h.b16 %v17
  %v144 = vunpack.c.l.b16 %v18
  %v145 = vunpack.c.h.b16 %v18
  %v146 = vunpack.c.l.b16 %v19
  %v147 = vunpack.c.h.b16 %v19
  %v148 = vunpack.c.l.b16 %v20
  %v149 = vunpack.c.h.b16 %v20
  %v150 = vunpack.c.l.b16 %v21
  %v151 = vunpack.c.h.b16 %v21
  %v152 = vunpack.c.l.b16 %v22
  %v153 = vunpack.c.h.b16 %v22
  %v154 = vunpack.c.l.b16 %v23
  %v155 = vunpack.c.h.b16 %v23
  %v156 = vunpack.c.l.b16 %v24
  %v157 = vunpack.c.h.b16 %v24
  %v158 = vunpack.c.l.b16 %v25
  %v159 = vunpack.c.h.b16 %v25
  %v160 = vunpack.c.l.b16 %v26
  %v161 = vunpack.c.h.b16 %v26
  %v162 = vunpack.c.l.b16 %v27
  %v163 = vunpack.c.h.b16 %v27
  %v164 = vunpack.c.l.b16 %v28
  %v165 = vunpack.c.h.b16 %v28
  %v166 = vunpack.c.l.b16 %v29
  %v167 = vunpack.c.h.b16 %v29
  %v168 = vunpack.c.l.b16 %v30
  %v169 = vunpack.c.h.b16 %v30
  %v170 = vunpack.c.l.b16 %v31
  %v171 = vunpack.c.h.b16 %v31
  %v172 = vunpack.c.l.b16 %v32
  %v173 = vunpack.c.h.b16 %v32
  %v174 = vunpack.c.l.b16 %v33
  %v175 = vunpack.c.h.b16 %v33
  %v176 = vunpack.c.l.b16 %v34
  %v177 = vunpack.c.h.b16 %v34
  %v178 = vunpack.c.l.b16 %v35
  %v179 = vunpack.c.h.b16 %v35
  %v180 = vunpack.c.l.b16 %v36
  %v181 = vunpack.c.h.b16 %v36
  %v182 = vunpack.c.l.b16 %v37
  %v183 = vunpack.c.h.b16 %v37
  %v184 = vunpack.c.l.b16 %v38
  %v185 = vunpack.c.h.b16 %v38
  %v186 = vunpack.c.l.b16 %v39
  %v187 = vunpack.c.h.b16 %v39
  %v188 = vunpack.c.l.b16 %v40
  %v189 = vunpack.c.h.b16 %v40
  %v190 = vpack.c.b16 %v142, %v138
  %v191 = vpack.c.b16 %v143, %v139
  %v192 = vpack.c.b16 %v144, %v140
  %v193 = vpack.c.b16 %v145, %v141
  %v194 = vpack.c.b16 %v150, %v146
  %v195 = vpack.c.b16 %v151, %v147
  %v196 = vpack.c.b16 %v152, %v148
  %v197 = vpack.c.b16 %v153, %v149
  %v198 = vpack.c.b16 %v158, %v154
  %v199 = vpack.c.b16 %v159, %v155
  %v200 = vpack.c.b16 %v160, %v156
  %v201 = vpack.c.b16 %v161, %v157
  %v202 = vpack.c.b16 %v166, %v162
  %v203 = vpack.c.b16 %v167, %v163
  %v204 = vpack.c.b16 %v168, %v164
  %v205 = vpack.c.b16 %v169, %v165
  %v206 = vpack.c.b16 %v174, %v170
  %v207 = vpack.c.b16 %v175, %v171
  %v208 = vpack.c.b16 %v176, %v172
  %v209 = vpack.c.b16 %v177, %v173
  %v210 = vpack.c.b16 %v182, %v178
  %v211 = vpack.c.b16 %v183, %v179
  %v212 = vpack.c.b16 %v184, %v180
  %v213 = vpack.c.b16 %v185, %v181
  %v214 = vpack.c.b16 %v186, %v186
  %v215 = vpack.c.b16 %v187, %v187
  %v216 = vpack.c.b16 %v188, %v188
  %v217 = vpack.c.b16 %v189, %v189
  %v310 = vunpack.c.l.b16 %v41
  %v311 = vunpack.c.l.b16 %v42
  %v312 = vunpack.c.l.b16 %v43
  %v313 = vunpack.c.l.b16 %v44
  %v314 = vunpack.c.l.b16 %v45
  %v315 = vunpack.c.l.b16 %v46
  %v316 = vunpack.c.l.b16 %v47
  %v317 = vunpack.c.l.b16 %v48
  %v318 = vunpack.c.l.b16 %v49
  %v319 = vunpack.c.l.b16 %v50
  %v320 = vunpack.c.l.b16 %v51
  %v321 = vunpack.c.l.b16 %v52
  %v322 = vunpack.c.l.b16 %v53
  %v323 = vunpack.c.l.b16 %v54
  %v324 = vunpack.c.l.b16 %v55
  %v325 = vunpack.c.l.b16 %v56
  %v326 = vunpack.c.l.b16 %v57
  %v327 = vunpack.c.l.b16 %v58
  %v328 = vunpack.c.l.b16 %v59
  %v329 = vunpack.c.l.b16 %v60
  %v330 = vunpack.c.l.b16 %v61
  %v331 = vunpack.c.l.b16 %v62
  %v332 = vunpack.c.l.b16 %v63
  %v333 = vunpack.c.l.b16 %v64
  %v334 = vunpack.c.l.b16 %v65
  %v335 = vunpack.c.l.b16 %v66
  %v336 = vunpack.c.l.b16 %v67
  %v337 = vunpack.c.l.b16 %v68
  %v338 = vunpack.c.l.b16 %v69
  %v339 = vunpack.c.l.b16 %v70
  %v340 = vunpack.c.l.b16 %v71
  %v341 = vunpack.c.l.b16 %v72
  %v342 = vunpack.c.l.b16 %v73
  %v343 = vunpack.c.l.b16 %v74
  %v344 = vunpack.c.l.b16 %v75
  %v345 = vunpack.c.l.b16 %v76
  %v346 = vunpack.c.l.b16 %v77
  %v347 = vunpack.c.l.b16 %v78
  %v348 = vunpack.c.l.b16 %v79
  %v349 = vunpack.c.l.b16 %v80
  %v350 = vunpack.c.l.b16 %v81
  %v351 = vunpack.c.l.b16 %v82
  %v352 = vunpack.c.l.b16 %v83
  %v353 = vunpack.c.l.b16 %v84
  %v354 = vunpack.c.l.b16 %v85
  %v355 = vunpack.c.l.b16 %v86
  %v356 = vunpack.c.l.b16 %v87
  %v357 = vunpack.c.l.b16 %v88
  %v358 = vunpack.c.l.b16 %v89
  %v359 = vunpack.c.l.b16 %v90
  %v360 = vunpack.c.l.b16 %v91
  %v361 = vunpack.c.l.b16 %v92
  %v362 = vunpack.c.l.b16 %v93
  %v363 = vunpack.c.l.b16 %v94
  %v364 = vunpack.c.l.b16 %v95
  %v365 = vunpack.c.l.b16 %v96
  %v366 = vunpack.c.l.b16 %v97
  %v367 = vunpack.c.l.b16 %v98
  %v368 = vunpack.c.l.b16 %v99
  %v369 = vunpack.c.l.b16 %v100
  %v370 = vunpack.c.l.b16 %v101
  %v371 = vunpack.c.l.b16 %v102
  %v372 = vunpack.c.l.b16 %v103
  %v373 = vunpack.c.l.b16 %v104
  %v374 = vpack.c.b16 %v311, %v310
  %v375 = vpack.c.b16 %v313, %v312
  %v376 = vpack.c.b16 %v315, %v314
  %v377 = vpack.c.b16 %v317, %v316
  %v378 = vpack.c.b16 %v319, %v318
  %v379 = vpack.c.b16 %v321, %v320
  %v380 = vpack.c.b16 %v323, %v322
  %v381 = vpack.c.b16 %v325, %v324
  %v382 = vpack.c.b16 %v327, %v326
  %v383 = vpack.c.b16 %v329, %v328
  %v384 = vpack.c.b16 %v331, %v330
  %v385 = vpack.c.b16 %v333, %v332
  %v386 = vpack.c.b16 %v335, %v334
  %v387 = vpack.c.b16 %v337, %v336
  %v388 = vpack.c.b16 %v339, %v338
  %v389 = vpack.c.b16 %v341, %v340
  %v390 = vpack.c.b16 %v343, %v342
  %v391 = vpack.c.b16 %v345, %v344
  %v392 = vpack.c.b16 %v347, %v346
  %v393 = vpack.c.b16 %v349, %v348
  %v394 = vpack.c.b16 %v351, %v350
  %v395 = vpack.c.b16 %v353, %v352
  %v396 = vpack.c.b16 %v355, %v354
  %v397 = vpack.c.b16 %v357, %v356
  %v398 = vpack.c.b16 %v359, %v358
  %v399 = vpack.c.b16 %v361, %v360
  %v400 = vpack.c.b16 %v363, %v362
  %v401 = vpack.c.b16 %v365, %v364
  %v402 = vpack.c.b16 %v367, %v366
  %v403 = vpack.c.b16 %v369, %v368
  %v404 = vpack.c.b16 %v371, %v370
  %v405 = vpack.c.b16 %v373, %v372
  %438 = vmatprep.subr.bf16.mxu0 0
  %439 = vmatpush1.bf16.msra.mxu0 %v374
  %440 = vmatprep.subr.bf16.mxu0 0
  %441 = vmatpush1.bf16.msra.mxu0 %v375
  %442 = vmatprep.subr.bf16.mxu0 0
  %443 = vmatpush1.bf16.msra.mxu0 %v376
  %444 = vmatprep.subr.bf16.mxu0 0
  %445 = vmatpush1.bf16.msra.mxu0 %v377
  %446 = vmatprep.subr.bf16.mxu0 0
  %447 = vmatpush1.bf16.msra.mxu0 %v378
  %448 = vmatprep.subr.bf16.mxu0 0
  %449 = vmatpush1.bf16.msra.mxu0 %v379
  %450 = vmatprep.subr.bf16.mxu0 0
  %451 = vmatpush1.bf16.msra.mxu0 %v380
  %452 = vmatprep.subr.bf16.mxu0 0
  %453 = vmatpush1.bf16.msra.mxu0 %v381
  %454 = vmatprep.subr.bf16.mxu0 0
  %455 = vmatpush1.bf16.msra.mxu0 %v382
  %456 = vmatprep.subr.bf16.mxu0 0
  %457 = vmatpush1.bf16.msra.mxu0 %v383
  %458 = vmatprep.subr.bf16.mxu0 0
  %459 = vmatpush1.bf16.msra.mxu0 %v384
  %460 = vmatprep.subr.bf16.mxu0 0
  %461 = vmatpush1.bf16.msra.mxu0 %v385
  %462 = vmatprep.subr.bf16.mxu0 0
  %463 = vmatpush1.bf16.msra.mxu0 %v386
  %464 = vmatprep.subr.bf16.mxu0 0
  %465 = vmatpush1.bf16.msra.mxu0 %v387
  %466 = vmatprep.subr.bf16.mxu0 0
  %467 = vmatpush1.bf16.msra.mxu0 %v388
  %468 = vmatprep.subr.bf16.mxu0 0
  %469 = vmatpush1.bf16.msra.mxu0 %v389
  %470 = vmatprep.mubr.bf16.mxu0 %v191
  %471 = vmatmul.mubr.bf16.gmra.mrb[0].mxu0 %v190
  %v472 = vpop.f32.mrb[0].mxu0
  %v473 = vadd.f32 %v110, %v472
  %v474 = vpop.f32.mrb[0].mxu0
  %v475 = vpop.f32.mrb[0].mxu0
  %v476 = vadd.f32 %v110, %v475
  %v477 = vpop.f32.mrb[0].mxu0
  %478 = vmatprep.mubr.bf16.mxu0 %v195
  %479 = vmatmul.mubr.bf16.gmra.mrb[0].mxu0 %v194
  %v480 = vpop.f32.mrb[0].mxu0
  %v481 = vadd.f32 %v110, %v480
  %v482 = vpop.f32.mrb[0].mxu0
  %v483 = vpop.f32.mrb[0].mxu0
  %v484 = vadd.f32 %v110, %v483
  %v485 = vpop.f32.mrb[0].mxu0
  %486 = vmatprep.mubr.bf16.mxu0 %v199
  %487 = vmatmul.mubr.bf16.gmra.mrb[0].mxu0 %v198
  %v488 = vpop.f32.mrb[0].mxu0
  %v489 = vadd.f32 %v110, %v488
  %v490 = vpop.f32.mrb[0].mxu0
  %v491 = vpop.f32.mrb[0].mxu0
  %v492 = vadd.f32 %v110, %v491
  %v493 = vpop.f32.mrb[0].mxu0
  %494 = vmatprep.mubr.bf16.mxu0 %v203
  %495 = vmatmul.mubr.bf16.gmra.mrb[0].mxu0 %v202
  %v496 = vpop.f32.mrb[0].mxu0
  %v497 = vadd.f32 %v110, %v496
  %v498 = vpop.f32.mrb[0].mxu0
  %v499 = vpop.f32.mrb[0].mxu0
  %v500 = vadd.f32 %v110, %v499
  %v501 = vpop.f32.mrb[0].mxu0
  %502 = vmatprep.mubr.bf16.mxu0 %v207
  %503 = vmatmul.mubr.bf16.gmra.mrb[0].mxu0 %v206
  %v504 = vpop.f32.mrb[0].mxu0
  %v505 = vadd.f32 %v110, %v504
  %v506 = vpop.f32.mrb[0].mxu0
  %v507 = vpop.f32.mrb[0].mxu0
  %v508 = vadd.f32 %v110, %v507
  %v509 = vpop.f32.mrb[0].mxu0
  %510 = vmatprep.mubr.bf16.mxu0 %v211
  %511 = vmatmul.mubr.bf16.gmra.mrb[0].mxu0 %v210
  %v512 = vpop.f32.mrb[0].mxu0
  %v513 = vadd.f32 %v110, %v512
  %v514 = vpop.f32.mrb[0].mxu0
  %v515 = vpop.f32.mrb[0].mxu0
  %v516 = vadd.f32 %v110, %v515
  %v517 = vpop.f32.mrb[0].mxu0
  %518 = vmatprep.mubr.bf16.mxu0 %v215
  %519 = vmatmul.mubr.bf16.gmra.mrb[0].mxu0 %v214
  %v520 = vpop.f32.mrb[0].mxu0
  %v521 = vadd.f32 %v110, %v520
  %v522 = vpop.f32.mrb[0].mxu0
  %v523 = vpop.f32.mrb[0].mxu0
  %v524 = vpop.f32.mrb[0].mxu0
  %525 = vdwg.mxu0
  %526 = vmatprep.subr.bf16.mxu0 0
  %527 = vmatpush1.bf16.msra.mxu0 %v390
  %528 = vmatprep.subr.bf16.mxu0 0
  %529 = vmatpush1.bf16.msra.mxu0 %v391
  %530 = vmatprep.subr.bf16.mxu0 0
  %531 = vmatpush1.bf16.msra.mxu0 %v392
  %532 = vmatprep.subr.bf16.mxu0 0
  %533 = vmatpush1.bf16.msra.mxu0 %v393
  %534 = vmatprep.subr.bf16.mxu0 0
  %535 = vmatpush1.bf16.msra.mxu0 %v394
  %536 = vmatprep.subr.bf16.mxu0 0
  %537 = vmatpush1.bf16.msra.mxu0 %v395
  %538 = vmatprep.subr.bf16.mxu0 0
  %539 = vmatpush1.bf16.msra.mxu0 %v396
  %540 = vmatprep.subr.bf16.mxu0 0
  %541 = vmatpush1.bf16.msra.mxu0 %v397
  %542 = vmatprep.subr.bf16.mxu0 0
  %543 = vmatpush1.bf16.msra.mxu0 %v398
  %544 = vmatprep.subr.bf16.mxu0 0
  %545 = vmatpush1.bf16.msra.mxu0 %v399
  %546 = vmatprep.subr.bf16.mxu0 0
  %547 = vmatpush1.bf16.msra.mxu0 %v400
  %548 = vmatprep.subr.bf16.mxu0 0
  %549 = vmatpush1.bf16.msra.mxu0 %v401
  %550 = vmatprep.subr.bf16.mxu0 0
  %551 = vmatpush1.bf16.msra.mxu0 %v402
  %552 = vmatprep.subr.bf16.mxu0 0
  %553 = vmatpush1.bf16.msra.mxu0 %v403
  %554 = vmatprep.subr.bf16.mxu0 0
  %555 = vmatpush1.bf16.msra.mxu0 %v404
  %556 = vmatprep.subr.bf16.mxu0 0
  %557 = vmatpush1.bf16.msra.mxu0 %v405
  %558 = vmatprep.mubr.bf16.mxu0 %v193
  %559 = vmatmul.mubr.bf16.gmra.mrb[0].mxu0 %v192
  %v560 = vpop.f32.mrb[0].mxu0
  %v561 = vadd.f32 %v473, %v560
  %v562 = vpop.f32.mrb[0].mxu0
  %v563 = vpop.f32.mrb[0].mxu0
  %v564 = vadd.f32 %v476, %v563
  %v565 = vpop.f32.mrb[0].mxu0
  %566 = vmatprep.mubr.bf16.mxu0 %v197
  %567 = vmatmul.mubr.bf16.gmra.mrb[0].mxu0 %v196
  %v568 = vpop.f32.mrb[0].mxu0
  %v569 = vadd.f32 %v481, %v568
  %v570 = vpop.f32.mrb[0].mxu0
  %v571 = vpop.f32.mrb[0].mxu0
  %v572 = vadd.f32 %v484, %v571
  %v573 = vpop.f32.mrb[0].mxu0
  %574 = vmatprep.mubr.bf16.mxu0 %v201
  %575 = vmatmul.mubr.bf16.gmra.mrb[0].mxu0 %v200
  %v576 = vpop.f32.mrb[0].mxu0
  %v577 = vadd.f32 %v489, %v576
  %v578 = vpop.f32.mrb[0].mxu0
  %v579 = vpop.f32.mrb[0].mxu0
  %v580 = vadd.f32 %v492, %v579
  %v581 = vpop.f32.mrb[0].mxu0
  %582 = vmatprep.mubr.bf16.mxu0 %v205
  %583 = vmatmul.mubr.bf16.gmra.mrb[0].mxu0 %v204
  %v584 = vpop.f32.mrb[0].mxu0
  %v585 = vadd.f32 %v497, %v584
  %v586 = vpop.f32.mrb[0].mxu0
  %v587 = vpop.f32.mrb[0].mxu0
  %v588 = vadd.f32 %v500, %v587
  %v589 = vpop.f32.mrb[0].mxu0
  %590 = vmatprep.mubr.bf16.mxu0 %v209
  %591 = vmatmul.mubr.bf16.gmra.mrb[0].mxu0 %v208
  %v592 = vpop.f32.mrb[0].mxu0
  %v593 = vadd.f32 %v505, %v592
  %v594 = vpop.f32.mrb[0].mxu0
  %v595 = vpop.f32.mrb[0].mxu0
  %v596 = vadd.f32 %v508, %v595
  %v597 = vpop.f32.mrb[0].mxu0
  %598 = vmatprep.mubr.bf16.mxu0 %v213
  %599 = vmatmul.mubr.bf16.gmra.mrb[0].mxu0 %v212
  %v600 = vpop.f32.mrb[0].mxu0
  %v601 = vadd.f32 %v513, %v600
  %v602 = vpop.f32.mrb[0].mxu0
  %v603 = vpop.f32.mrb[0].mxu0
  %v604 = vadd.f32 %v516, %v603
  %v605 = vpop.f32.mrb[0].mxu0
  %606 = vmatprep.mubr.bf16.mxu0 %v217
  %607 = vmatmul.mubr.bf16.gmra.mrb[0].mxu0 %v216
  %v608 = vpop.f32.mrb[0].mxu0
  %v609 = vadd.f32 %v521, %v608
  %v610 = vpop.f32.mrb[0].mxu0
  %v611 = vpop.f32.mrb[0].mxu0
  %v612 = vpop.f32.mrb[0].mxu0
  %613 = vdwg.mxu0
  %v614 = vmax.f32 %v561, 0.0
  %v615 = vmax.f32 %v564, 0.0
  %v616 = vmax.f32 %v569, 0.0
  %v617 = vmax.f32 %v572, 0.0
  %v618 = vmax.f32 %v577, 0.0
  %v619 = vmax.f32 %v580, 0.0
  %v620 = vmax.f32 %v585, 0.0
  %v621 = vmax.f32 %v588, 0.0
  %v622 = vmax.f32 %v593, 0.0
  %v623 = vmax.f32 %v596, 0.0
  %v624 = vmax.f32 %v601, 0.0
  %v625 = vmax.f32 %v604, 0.0
  %v626 = vmax.f32 %v609, 0.0
  %vm627 = vcmask 523264
  %628 = vst.msk [vmem:[%s3] sm:$0xff] %vm627, %v614
  %629 = vst.msk [vmem:[%s3 + $0x8] sm:$0xff] %vm627, %v615
  %630 = vst.msk [vmem:[%s3 + $0x10] sm:$0xff] %vm627, %v616
  %631 = vst.msk [vmem:[%s3 + $0x18] sm:$0xff] %vm627, %v617
  %632 = vst.msk [vmem:[%s3 + $0x20] sm:$0xff] %vm627, %v618
  %633 = vst.msk [vmem:[%s3 + $0x28] sm:$0xff] %vm627, %v619
  %634 = vst.msk [vmem:[%s3 + $0x30] sm:$0xff] %vm627, %v620
  %635 = vst.msk [vmem:[%s3 + $0x38] sm:$0xff] %vm627, %v621
  %636 = vst.msk [vmem:[%s3 + $0x40] sm:$0xff] %vm627, %v622
  %637 = vst.msk [vmem:[%s3 + $0x48] sm:$0xff] %vm627, %v623
  %638 = vst.msk [vmem:[%s3 + $0x50] sm:$0xff] %vm627, %v624
  %639 = vst.msk [vmem:[%s3 + $0x58] sm:$0xff] %vm627, %v625
  %640 = vst.msk [vmem:[%s3 + $0x60] sm:$0xff] %vm627, %v626
  // Predicated region
  $region14: #{conv_encoder_forward.4} parent=0 // pred_check
    _
  $region15: #{conv_encoder_forward.4} parent=0 // pred_check_branch
    %642 = sbr.rel (0) target = $region17
  $region16: #{conv_encoder_forward.4} parent=0 // pred_region
    _
  $region17: #{conv_encoder_forward.4} parent=0 // pred_fallthru
    _
  // Predicated region
  $region18: #{conv_encoder_forward.4} parent=0 // pred_check
    _
  $region19: #{conv_encoder_forward.4} parent=0 // pred_check_branch
    %644 = sbr.rel (0) target = $region21
  $region20: #{conv_encoder_forward.4} parent=0 // pred_region
    _
  $region21: #{conv_encoder_forward.4} parent=0 // pred_fallthru
    _

// kernel: conv_encoder_forward.5
$region0: #{conv_encoder_forward.5}
  #allocation0 [shape = 'u32[]', space=smem, size = 0x4, offset = 0x4, fixed_abs, tag = 'smem constant byte address 0x4 - core index']
  #allocation1 [shape = 'u32[144,128]{1,0:T(1,128)}', space=vmem, size = 0x12000, scoped, tag = 'internal scratch']
  %s0 = inlined_call_operand.vmem [shape: bf16[8,3136], index: 0, kind: input, shape index: {}]
  %s1 = inlined_call_operand.vmem [shape: bf16[3136,128], index: 1, kind: input, shape index: {}]
  %s2 = inlined_call_operand.vmem [shape: f32[1,128], index: 2, kind: input, shape index: {}]
  %s3 = inlined_call_operand.vmem [shape: f32[8,128], index: 3, kind: output, shape index: {}]
  %s4 = sld [smem:[#allocation0]]
  $region22: #{conv_encoder_forward.5} parent=0
    _
  %s6 = ssub.s32 1, %s4
  %s7 = scalar_select 0, %s6, %s4
  // Predicated region
  $region2: #{conv_encoder_forward.5} parent=0 // pred_check
    _
  $region3: #{conv_encoder_forward.5} parent=0 // pred_check_branch
    %9 = sbr.rel (0) target = $region5
  $region4: #{conv_encoder_forward.5} parent=0 // pred_region
    _
  $region5: #{conv_encoder_forward.5} parent=0 // pred_fallthru
    _
  // Predicated region
  $region6: #{conv_encoder_forward.5} parent=0 // pred_check
    _
  $region7: #{conv_encoder_forward.5} parent=0 // pred_check_branch
    %11 = sbr.rel (0) target = $region9
  $region8: #{conv_encoder_forward.5} parent=0 // pred_region
    _
  $region9: #{conv_encoder_forward.5} parent=0 // pred_fallthru
    _
  // Predicated region
  $region10: #{conv_encoder_forward.5} parent=0 // pred_check
    _
  $region11: #{conv_encoder_forward.5} parent=0 // pred_check_branch
    %13 = sbr.rel (0) target = $region13
  $region12: #{conv_encoder_forward.5} parent=0 // pred_region
    _
  $region13: #{conv_encoder_forward.5} parent=0 // pred_fallthru
    _
  %v15 = vld [vmem:[%s0] sm:$0xff]
  %v16 = vld [vmem:[%s0 + $0x8] sm:$0xff]
  %v17 = vld [vmem:[%s0 + $0x10] sm:$0xff]
  %v18 = vld [vmem:[%s0 + $0x18] sm:$0xff]
  %v19 = vld [vmem:[%s0 + $0x20] sm:$0xff]
  %v20 = vld [vmem:[%s0 + $0x28] sm:$0xff]
  %v21 = vld [vmem:[%s0 + $0x30] sm:$0xff]
  %v22 = vld [vmem:[%s0 + $0x38] sm:$0xff]
  %v23 = vld [vmem:[%s0 + $0x40] sm:$0xff]
  %v24 = vld [vmem:[%s0 + $0x48] sm:$0xff]
  %v25 = vld [vmem:[%s0 + $0x50] sm:$0xff]
  %v26 = vld [vmem:[%s0 + $0x58] sm:$0xff]
  %v27 = vld [vmem:[%s0 + $0x60] sm:$0xf]
  %v28 = vld [vmem:[%s1] sm:$0xf]
  %v29 = vld [vmem:[%s1 + $0x4] sm:$0xf]
  %v30 = vld [vmem:[%s1 + $0x8] sm:$0xf]
  %v31 = vld [vmem:[%s1 + $0xc] sm:$0xf]
  %v32 = vld [vmem:[%s1 + $0x10] sm:$0xf]
  %v33 = vld [vmem:[%s1 + $0x14] sm:$0xf]
  %v34 = vld [vmem:[%s1 + $0x18] sm:$0xf]
  %v35 = vld [vmem:[%s1 + $0x1c] sm:$0xf]
  %v36 = vld [vmem:[%s1 + $0x20] sm:$0xf]
  %v37 = vld [vmem:[%s1 + $0x24] sm:$0xf]
  %v38 = vld [vmem:[%s1 + $0x28] sm:$0xf]
  %v39 = vld [vmem:[%s1 + $0x2c] sm:$0xf]
  %v40 = vld [vmem:[%s1 + $0x30] sm:$0xf]
  %v41 = vld [vmem:[%s1 + $0x34] sm:$0xf]
  %v42 = vld [vmem:[%s1 + $0x38] sm:$0xf]
  %v43 = vld [vmem:[%s1 + $0x3c] sm:$0xf]
  %v44 = vld [vmem:[%s1 + $0x40] sm:$0xf]
  %v45 = vld [vmem:[%s1 + $0x44] sm:$0xf]
  %v46 = vld [vmem:[%s1 + $0x48] sm:$0xf]
  %v47 = vld [vmem:[%s1 + $0x4c] sm:$0xf]
  %v48 = vld [vmem:[%s1 + $0x50] sm:$0xf]
  %v49 = vld [vmem:[%s1 + $0x54] sm:$0xf]
  %v50 = vld [vmem:[%s1 + $0x58] sm:$0xf]
  %v51 = vld [vmem:[%s1 + $0x5c] sm:$0xf]
  %v52 = vld [vmem:[%s1 + $0x60] sm:$0xf]
  %v53 = vld [vmem:[%s1 + $0x64] sm:$0xf]
  %v54 = vld [vmem:[%s1 + $0x68] sm:$0xf]
  %v55 = vld [vmem:[%s1 + $0x6c] sm:$0xf]
  %v56 = vld [vmem:[%s1 + $0x70] sm:$0xf]
  %v57 = vld [vmem:[%s1 + $0x74] sm:$0xf]
  %v58 = vld [vmem:[%s1 + $0x78] sm:$0xf]
  %v59 = vld [vmem:[%s1 + $0x7c] sm:$0xf]
  %v60 = vld [vmem:[%s1 + $0x80] sm:$0xf]
  %v61 = vld [vmem:[%s1 + $0x84] sm:$0xf]
  %v62 = vld [vmem:[%s1 + $0x88] sm:$0xf]
  %v63 = vld [vmem:[%s1 + $0x8c] sm:$0xf]
  %v64 = vld [vmem:[%s1 + $0x90] sm:$0xf]
  %v65 = vld [vmem:[%s1 + $0x94] sm:$0xf]
  %v66 = vld [vmem:[%s1 + $0x98] sm:$0xf]
  %v67 = vld [vmem:[%s1 + $0x9c] sm:$0xf]
  %v68 = vld [vmem:[%s1 + $0xa0] sm:$0xf]
  %v69 = vld [vmem:[%s1 + $0xa4] sm:$0xf]
  %v70 = vld [vmem:[%s1 + $0xa8] sm:$0xf]
  %v71 = vld [vmem:[%s1 + $0xac] sm:$0xf]
  %v72 = vld [vmem:[%s1 + $0xb0] sm:$0xf]
  %v73 = vld [vmem:[%s1 + $0xb4] sm:$0xf]
  %v74 = vld [vmem:[%s1 + $0xb8] sm:$0xf]
  %v75 = vld [vmem:[%s1 + $0xbc] sm:$0xf]
  %v76 = vld [vmem:[%s1 + $0xc0] sm:$0xf]
  %v77 = vld [vmem:[%s1 + $0xc4] sm:$0xf]
  %v78 = vld [vmem:[%s1 + $0xc8] sm:$0xf]
  %v79 = vld [vmem:[%s1 + $0xcc] sm:$0xf]
  %v80 = vld [vmem:[%s1 + $0xd0] sm:$0xf]
  %v81 = vld [vmem:[%s1 + $0xd4] sm:$0xf]
  %v82 = vld [vmem:[%s1 + $0xd8] sm:$0xf]
  %v83 = vld [vmem:[%s1 + $0xdc] sm:$0xf]
  %v84 = vld [vmem:[%s1 + $0xe0] sm:$0xf]
  %v85 = vld [vmem:[%s1 + $0xe4] sm:$0xf]
  %v86 = vld [vmem:[%s1 + $0xe8] sm:$0xf]
  %v87 = vld [vmem:[%s1 + $0xec] sm:$0xf]
  %v88 = vld [vmem:[%s1 + $0xf0] sm:$0xf]
  %v89 = vld [vmem:[%s1 + $0xf4] sm:$0xf]
  %v90 = vld [vmem:[%s1 + $0xf8] sm:$0xf]
  %v91 = vld [vmem:[%s1 + $0xfc] sm:$0xf]
  %v92 = vld [vmem:[%s1 + $0x100] sm:$0xf]
  %v93 = vld [vmem:[%s1 + $0x104] sm:$0xf]
  %v94 = vld [vmem:[%s1 + $0x108] sm:$0xf]
  %v95 = vld [vmem:[%s1 + $0x10c] sm:$0xf]
  %v96 = vld [vmem:[%s1 + $0x110] sm:$0xf]
  %v97 = vld [vmem:[%s1 + $0x114] sm:$0xf]
  %v98 = vld [vmem:[%s1 + $0x118] sm:$0xf]
  %v99 = vld [vmem:[%s1 + $0x11c] sm:$0xf]
  %v100 = vld [vmem:[%s1 + $0x120] sm:$0xf]
  %v101 = vld [vmem:[%s1 + $0x124] sm:$0xf]
  %v102 = vld [vmem:[%s1 + $0x128] sm:$0xf]
  %v103 = vld [vmem:[%s1 + $0x12c] sm:$0xf]
  %v104 = vld [vmem:[%s1 + $0x130] sm:$0xf]
  %v105 = vld [vmem:[%s1 + $0x134] sm:$0xf]
  %v106 = vld [vmem:[%s1 + $0x138] sm:$0xf]
  %v107 = vld [vmem:[%s1 + $0x13c] sm:$0xf]
  %v108 = vld [vmem:[%s1 + $0x140] sm:$0xf]
  %v109 = vld [vmem:[%s1 + $0x144] sm:$0xf]
  %v110 = vld [vmem:[%s1 + $0x148] sm:$0xf]
  %v111 = vld [vmem:[%s1 + $0x14c] sm:$0xf]
  %v112 = vld [vmem:[%s1 + $0x150] sm:$0xf]
  %v113 = vld [vmem:[%s1 + $0x154] sm:$0xf]
  %v114 = vld [vmem:[%s1 + $0x158] sm:$0xf]
  %v115 = vld [vmem:[%s1 + $0x15c] sm:$0xf]
  %v116 = vld [vmem:[%s1 + $0x160] sm:$0xf]
  %v117 = vld [vmem:[%s1 + $0x164] sm:$0xf]
  %v118 = vld [vmem:[%s1 + $0x168] sm:$0xf]
  %v119 = vld [vmem:[%s1 + $0x16c] sm:$0xf]
  %v120 = vld [vmem:[%s1 + $0x170] sm:$0xf]
  %v121 = vld [vmem:[%s1 + $0x174] sm:$0xf]
  %v122 = vld [vmem:[%s1 + $0x178] sm:$0xf]
  %v123 = vld [vmem:[%s1 + $0x17c] sm:$0xf]
  %v124 = vld [vmem:[%s1 + $0x180] sm:$0xf]
  %v125 = vld [vmem:[%s1 + $0x184] sm:$0xf]
  %v126 = vld [vmem:[%s1 + $0x188] sm:$0xf]
  %v127 = vld [vmem:[%s1 + $0x18c] sm:$0xf]
  %v128 = vld [vmem:[%s1 + $0x190] sm:$0xf]
  %v129 = vld [vmem:[%s1 + $0x194] sm:$0xf]
  %v130 = vld [vmem:[%s1 + $0x198] sm:$0xf]
  %v131 = vld [vmem:[%s1 + $0x19c] sm:$0xf]
  %v132 = vld [vmem:[%s1 + $0x1a0] sm:$0xf]
  %v133 = vld [vmem:[%s1 + $0x1a4] sm:$0xf]
  %v134 = vld [vmem:[%s1 + $0x1a8] sm:$0xf]
  %v135 = vld [vmem:[%s1 + $0x1ac] sm:$0xf]
  %v136 = vld [vmem:[%s1 + $0x1b0] sm:$0xf]
  %v137 = vld [vmem:[%s1 + $0x1b4] sm:$0xf]
  %v138 = vld [vmem:[%s1 + $0x1b8] sm:$0xf]
  %v139 = vld [vmem:[%s1 + $0x1bc] sm:$0xf]
  %v140 = vld [vmem:[%s1 + $0x1c0] sm:$0xf]
  %v141 = vld [vmem:[%s1 + $0x1c4] sm:$0xf]
  %v142 = vld [vmem:[%s1 + $0x1c8] sm:$0xf]
  %v143 = vld [vmem:[%s1 + $0x1cc] sm:$0xf]
  %v144 = vld [vmem:[%s1 + $0x1d0] sm:$0xf]
  %v145 = vld [vmem:[%s1 + $0x1d4] sm:$0xf]
  %v146 = vld [vmem:[%s1 + $0x1d8] sm:$0xf]
  %v147 = vld [vmem:[%s1 + $0x1dc] sm:$0xf]
  %v148 = vld [vmem:[%s1 + $0x1e0] sm:$0xf]
  %v149 = vld [vmem:[%s1 + $0x1e4] sm:$0xf]
  %v150 = vld [vmem:[%s1 + $0x1e8] sm:$0xf]
  %v151 = vld [vmem:[%s1 + $0x1ec] sm:$0xf]
  %v152 = vld [vmem:[%s1 + $0x1f0] sm:$0xf]
  %v153 = vld [vmem:[%s1 + $0x1f4] sm:$0xf]
  %v154 = vld [vmem:[%s1 + $0x1f8] sm:$0xf]
  %v155 = vld [vmem:[%s1 + $0x1fc] sm:$0xf]
  %v156 = vld [vmem:[%s1 + $0x200] sm:$0xf]
  %v157 = vld [vmem:[%s1 + $0x204] sm:$0xf]
  %v158 = vld [vmem:[%s1 + $0x208] sm:$0xf]
  %v159 = vld [vmem:[%s1 + $0x20c] sm:$0xf]
  %v160 = vld [vmem:[%s1 + $0x210] sm:$0xf]
  %v161 = vld [vmem:[%s1 + $0x214] sm:$0xf]
  %v162 = vld [vmem:[%s1 + $0x218] sm:$0xf]
  %v163 = vld [vmem:[%s1 + $0x21c] sm:$0xf]
  %v164 = vld [vmem:[%s1 + $0x220] sm:$0xf]
  %v165 = vld [vmem:[%s1 + $0x224] sm:$0xf]
  %v166 = vld [vmem:[%s1 + $0x228] sm:$0xf]
  %v167 = vld [vmem:[%s1 + $0x22c] sm:$0xf]
  %v168 = vld [vmem:[%s1 + $0x230] sm:$0xf]
  %v169 = vld [vmem:[%s1 + $0x234] sm:$0xf]
  %v170 = vld [vmem:[%s1 + $0x238] sm:$0xf]
  %v171 = vld [vmem:[%s1 + $0x23c] sm:$0xf]
  %v172 = vld [vmem:[%s1 + $0x240] sm:$0xf]
  %v173 = vld [vmem:[%s1 + $0x244] sm:$0xf]
  %v174 = vld [vmem:[%s1 + $0x248] sm:$0xf]
  %v175 = vld [vmem:[%s1 + $0x24c] sm:$0xf]
  %v176 = vld [vmem:[%s1 + $0x250] sm:$0xf]
  %v177 = vld [vmem:[%s1 + $0x254] sm:$0xf]
  %v178 = vld [vmem:[%s1 + $0x258] sm:$0xf]
  %v179 = vld [vmem:[%s1 + $0x25c] sm:$0xf]
  %v180 = vld [vmem:[%s1 + $0x260] sm:$0xf]
  %v181 = vld [vmem:[%s1 + $0x264] sm:$0xf]
  %v182 = vld [vmem:[%s1 + $0x268] sm:$0xf]
  %v183 = vld [vmem:[%s1 + $0x26c] sm:$0xf]
  %v184 = vld [vmem:[%s1 + $0x270] sm:$0xf]
  %v185 = vld [vmem:[%s1 + $0x274] sm:$0xf]
  %v186 = vld [vmem:[%s1 + $0x278] sm:$0xf]
  %v187 = vld [vmem:[%s1 + $0x27c] sm:$0xf]
  %v188 = vld [vmem:[%s1 + $0x280] sm:$0xf]
  %v189 = vld [vmem:[%s1 + $0x284] sm:$0xf]
  %v190 = vld [vmem:[%s1 + $0x288] sm:$0xf]
  %v191 = vld [vmem:[%s1 + $0x28c] sm:$0xf]
  %v192 = vld [vmem:[%s1 + $0x290] sm:$0xf]
  %v193 = vld [vmem:[%s1 + $0x294] sm:$0xf]
  %v194 = vld [vmem:[%s1 + $0x298] sm:$0xf]
  %v195 = vld [vmem:[%s1 + $0x29c] sm:$0xf]
  %v196 = vld [vmem:[%s1 + $0x2a0] sm:$0xf]
  %v197 = vld [vmem:[%s1 + $0x2a4] sm:$0xf]
  %v198 = vld [vmem:[%s1 + $0x2a8] sm:$0xf]
  %v199 = vld [vmem:[%s1 + $0x2ac] sm:$0xf]
  %v200 = vld [vmem:[%s1 + $0x2b0] sm:$0xf]
  %v201 = vld [vmem:[%s1 + $0x2b4] sm:$0xf]
  %v202 = vld [vmem:[%s1 + $0x2b8] sm:$0xf]
  %v203 = vld [vmem:[%s1 + $0x2bc] sm:$0xf]
  %v204 = vld [vmem:[%s1 + $0x2c0] sm:$0xf]
  %v205 = vld [vmem:[%s1 + $0x2c4] sm:$0xf]
  %v206 = vld [vmem:[%s1 + $0x2c8] sm:$0xf]
  %v207 = vld [vmem:[%s1 + $0x2cc] sm:$0xf]
  %v208 = vld [vmem:[%s1 + $0x2d0] sm:$0xf]
  %v209 = vld [vmem:[%s1 + $0x2d4] sm:$0xf]
  %v210 = vld [vmem:[%s1 + $0x2d8] sm:$0xf]
  %v211 = vld [vmem:[%s1 + $0x2dc] sm:$0xf]
  %v212 = vld [vmem:[%s1 + $0x2e0] sm:$0xf]
  %v213 = vld [vmem:[%s1 + $0x2e4] sm:$0xf]
  %v214 = vld [vmem:[%s1 + $0x2e8] sm:$0xf]
  %v215 = vld [vmem:[%s1 + $0x2ec] sm:$0xf]
  %v216 = vld [vmem:[%s1 + $0x2f0] sm:$0xf]
  %v217 = vld [vmem:[%s1 + $0x2f4] sm:$0xf]
  %v218 = vld [vmem:[%s1 + $0x2f8] sm:$0xf]
  %v219 = vld [vmem:[%s1 + $0x2fc] sm:$0xf]
  %v220 = vld [vmem:[%s1 + $0x300] sm:$0xf]
  %v221 = vld [vmem:[%s1 + $0x304] sm:$0xf]
  %v222 = vld [vmem:[%s1 + $0x308] sm:$0xf]
  %v223 = vld [vmem:[%s1 + $0x30c] sm:$0xf]
  %v224 = vld [vmem:[%s1 + $0x310] sm:$0xf]
  %v225 = vld [vmem:[%s1 + $0x314] sm:$0xf]
  %v226 = vld [vmem:[%s1 + $0x318] sm:$0xf]
  %v227 = vld [vmem:[%s1 + $0x31c] sm:$0xf]
  %v228 = vld [vmem:[%s1 + $0x320] sm:$0xf]
  %v229 = vld [vmem:[%s1 + $0x324] sm:$0xf]
  %v230 = vld [vmem:[%s1 + $0x328] sm:$0xf]
  %v231 = vld [vmem:[%s1 + $0x32c] sm:$0xf]
  %v232 = vld [vmem:[%s1 + $0x330] sm:$0xf]
  %v233 = vld [vmem:[%s1 + $0x334] sm:$0xf]
  %v234 = vld [vmem:[%s1 + $0x338] sm:$0xf]
  %v235 = vld [vmem:[%s1 + $0x33c] sm:$0xf]
  %v236 = vld [vmem:[%s1 + $0x340] sm:$0xf]
  %v237 = vld [vmem:[%s1 + $0x344] sm:$0xf]
  %v238 = vld [vmem:[%s1 + $0x348] sm:$0xf]
  %v239 = vld [vmem:[%s1 + $0x34c] sm:$0xf]
  %v240 = vld [vmem:[%s1 + $0x350] sm:$0xf]
  %v241 = vld [vmem:[%s1 + $0x354] sm:$0xf]
  %v242 = vld [vmem:[%s1 + $0x358] sm:$0xf]
  %v243 = vld [vmem:[%s1 + $0x35c] sm:$0xf]
  %v244 = vld [vmem:[%s1 + $0x360] sm:$0xf]
  %v245 = vld [vmem:[%s1 + $0x364] sm:$0xf]
  %v246 = vld [vmem:[%s1 + $0x368] sm:$0xf]
  %v247 = vld [vmem:[%s1 + $0x36c] sm:$0xf]
  %v248 = vld [vmem:[%s1 + $0x370] sm:$0xf]
  %v249 = vld [vmem:[%s1 + $0x374] sm:$0xf]
  %v250 = vld [vmem:[%s1 + $0x378] sm:$0xf]
  %v251 = vld [vmem:[%s1 + $0x37c] sm:$0xf]
  %v252 = vld [vmem:[%s1 + $0x380] sm:$0xf]
  %v253 = vld [vmem:[%s1 + $0x384] sm:$0xf]
  %v254 = vld [vmem:[%s1 + $0x388] sm:$0xf]
  %v255 = vld [vmem:[%s1 + $0x38c] sm:$0xf]
  %v256 = vld [vmem:[%s1 + $0x390] sm:$0xf]
  %v257 = vld [vmem:[%s1 + $0x394] sm:$0xf]
  %v258 = vld [vmem:[%s1 + $0x398] sm:$0xf]
  %v259 = vld [vmem:[%s1 + $0x39c] sm:$0xf]
  %v260 = vld [vmem:[%s1 + $0x3a0] sm:$0xf]
  %v261 = vld [vmem:[%s1 + $0x3a4] sm:$0xf]
  %v262 = vld [vmem:[%s1 + $0x3a8] sm:$0xf]
  %v263 = vld [vmem:[%s1 + $0x3ac] sm:$0xf]
  %v264 = vld [vmem:[%s1 + $0x3b0] sm:$0xf]
  %v265 = vld [vmem:[%s1 + $0x3b4] sm:$0xf]
  %v266 = vld [vmem:[%s1 + $0x3b8] sm:$0xf]
  %v267 = vld [vmem:[%s1 + $0x3bc] sm:$0xf]
  %v268 = vld [vmem:[%s1 + $0x3c0] sm:$0xf]
  %v269 = vld [vmem:[%s1 + $0x3c4] sm:$0xf]
  %v270 = vld [vmem:[%s1 + $0x3c8] sm:$0xf]
  %v271 = vld [vmem:[%s1 + $0x3cc] sm:$0xf]
  %v272 = vld [vmem:[%s1 + $0x3d0] sm:$0xf]
  %v273 = vld [vmem:[%s1 + $0x3d4] sm:$0xf]
  %v274 = vld [vmem:[%s1 + $0x3d8] sm:$0xf]
  %v275 = vld [vmem:[%s1 + $0x3dc] sm:$0xf]
  %v276 = vld [vmem:[%s1 + $0x3e0] sm:$0xf]
  %v277 = vld [vmem:[%s1 + $0x3e4] sm:$0xf]
  %v278 = vld [vmem:[%s1 + $0x3e8] sm:$0xf]
  %v279 = vld [vmem:[%s1 + $0x3ec] sm:$0xf]
  %v280 = vld [vmem:[%s1 + $0x3f0] sm:$0xf]
  %v281 = vld [vmem:[%s1 + $0x3f4] sm:$0xf]
  %v282 = vld [vmem:[%s1 + $0x3f8] sm:$0xf]
  %v283 = vld [vmem:[%s1 + $0x3fc] sm:$0xf]
  %v284 = vld [vmem:[%s1 + $0x400] sm:$0xf]
  %v285 = vld [vmem:[%s1 + $0x404] sm:$0xf]
  %v286 = vld [vmem:[%s1 + $0x408] sm:$0xf]
  %v287 = vld [vmem:[%s1 + $0x40c] sm:$0xf]
  %v288 = vld [vmem:[%s1 + $0x410] sm:$0xf]
  %v289 = vld [vmem:[%s1 + $0x414] sm:$0xf]
  %v290 = vld [vmem:[%s1 + $0x418] sm:$0xf]
  %v291 = vld [vmem:[%s1 + $0x41c] sm:$0xf]
  %v292 = vld [vmem:[%s1 + $0x420] sm:$0xf]
  %v293 = vld [vmem:[%s1 + $0x424] sm:$0xf]
  %v294 = vld [vmem:[%s1 + $0x428] sm:$0xf]
  %v295 = vld [vmem:[%s1 + $0x42c] sm:$0xf]
  %v296 = vld [vmem:[%s1 + $0x430] sm:$0xf]
  %v297 = vld [vmem:[%s1 + $0x434] sm:$0xf]
  %v298 = vld [vmem:[%s1 + $0x438] sm:$0xf]
  %v299 = vld [vmem:[%s1 + $0x43c] sm:$0xf]
  %v300 = vld [vmem:[%s1 + $0x440] sm:$0xf]
  %v301 = vld [vmem:[%s1 + $0x444] sm:$0xf]
  %v302 = vld [vmem:[%s1 + $0x448] sm:$0xf]
  %v303 = vld [vmem:[%s1 + $0x44c] sm:$0xf]
  %v304 = vld [vmem:[%s1 + $0x450] sm:$0xf]
  %v305 = vld [vmem:[%s1 + $0x454] sm:$0xf]
  %v306 = vld [vmem:[%s1 + $0x458] sm:$0xf]
  %v307 = vld [vmem:[%s1 + $0x45c] sm:$0xf]
  %v308 = vld [vmem:[%s1 + $0x460] sm:$0xf]
  %v309 = vld [vmem:[%s1 + $0x464] sm:$0xf]
  %v310 = vld [vmem:[%s1 + $0x468] sm:$0xf]
  %v311 = vld [vmem:[%s1 + $0x46c] sm:$0xf]
  %v312 = vld [vmem:[%s1 + $0x470] sm:$0xf]
  %v313 = vld [vmem:[%s1 + $0x474] sm:$0xf]
  %v314 = vld [vmem:[%s1 + $0x478] sm:$0xf]
  %v315 = vld [vmem:[%s1 + $0x47c] sm:$0xf]
  %v316 = vld [vmem:[%s1 + $0x480] sm:$0xf]
  %v317 = vld [vmem:[%s1 + $0x484] sm:$0xf]
  %v318 = vld [vmem:[%s1 + $0x488] sm:$0xf]
  %v319 = vld [vmem:[%s1 + $0x48c] sm:$0xf]
  %v320 = vld [vmem:[%s1 + $0x490] sm:$0xf]
  %v321 = vld [vmem:[%s1 + $0x494] sm:$0xf]
  %v322 = vld [vmem:[%s1 + $0x498] sm:$0xf]
  %v323 = vld [vmem:[%s1 + $0x49c] sm:$0xf]
  %v324 = vld [vmem:[%s1 + $0x4a0] sm:$0xf]
  %v325 = vld [vmem:[%s1 + $0x4a4] sm:$0xf]
  %v326 = vld [vmem:[%s1 + $0x4a8] sm:$0xf]
  %v327 = vld [vmem:[%s1 + $0x4ac] sm:$0xf]
  %v328 = vld [vmem:[%s1 + $0x4b0] sm:$0xf]
  %v329 = vld [vmem:[%s1 + $0x4b4] sm:$0xf]
  %v330 = vld [vmem:[%s1 + $0x4b8] sm:$0xf]
  %v331 = vld [vmem:[%s1 + $0x4bc] sm:$0xf]
  %v332 = vld [vmem:[%s1 + $0x4c0] sm:$0xf]
  %v333 = vld [vmem:[%s1 + $0x4c4] sm:$0xf]
  %v334 = vld [vmem:[%s1 + $0x4c8] sm:$0xf]
  %v335 = vld [vmem:[%s1 + $0x4cc] sm:$0xf]
  %v336 = vld [vmem:[%s1 + $0x4d0] sm:$0xf]
  %v337 = vld [vmem:[%s1 + $0x4d4] sm:$0xf]
  %v338 = vld [vmem:[%s1 + $0x4d8] sm:$0xf]
  %v339 = vld [vmem:[%s1 + $0x4dc] sm:$0xf]
  %v340 = vld [vmem:[%s1 + $0x4e0] sm:$0xf]
  %v341 = vld [vmem:[%s1 + $0x4e4] sm:$0xf]
  %v342 = vld [vmem:[%s1 + $0x4e8] sm:$0xf]
  %v343 = vld [vmem:[%s1 + $0x4ec] sm:$0xf]
  %v344 = vld [vmem:[%s1 + $0x4f0] sm:$0xf]
  %v345 = vld [vmem:[%s1 + $0x4f4] sm:$0xf]
  %v346 = vld [vmem:[%s1 + $0x4f8] sm:$0xf]
  %v347 = vld [vmem:[%s1 + $0x4fc] sm:$0xf]
  %v348 = vld [vmem:[%s1 + $0x500] sm:$0xf]
  %v349 = vld [vmem:[%s1 + $0x504] sm:$0xf]
  %v350 = vld [vmem:[%s1 + $0x508] sm:$0xf]
  %v351 = vld [vmem:[%s1 + $0x50c] sm:$0xf]
  %v352 = vld [vmem:[%s1 + $0x510] sm:$0xf]
  %v353 = vld [vmem:[%s1 + $0x514] sm:$0xf]
  %v354 = vld [vmem:[%s1 + $0x518] sm:$0xf]
  %v355 = vld [vmem:[%s1 + $0x51c] sm:$0xf]
  %v356 = vld [vmem:[%s1 + $0x520] sm:$0xf]
  %v357 = vld [vmem:[%s1 + $0x524] sm:$0xf]
  %v358 = vld [vmem:[%s1 + $0x528] sm:$0xf]
  %v359 = vld [vmem:[%s1 + $0x52c] sm:$0xf]
  %v360 = vld [vmem:[%s1 + $0x530] sm:$0xf]
  %v361 = vld [vmem:[%s1 + $0x534] sm:$0xf]
  %v362 = vld [vmem:[%s1 + $0x538] sm:$0xf]
  %v363 = vld [vmem:[%s1 + $0x53c] sm:$0xf]
  %v364 = vld [vmem:[%s1 + $0x540] sm:$0xf]
  %v365 = vld [vmem:[%s1 + $0x544] sm:$0xf]
  %v366 = vld [vmem:[%s1 + $0x548] sm:$0xf]
  %v367 = vld [vmem:[%s1 + $0x54c] sm:$0xf]
  %v368 = vld [vmem:[%s1 + $0x550] sm:$0xf]
  %v369 = vld [vmem:[%s1 + $0x554] sm:$0xf]
  %v370 = vld [vmem:[%s1 + $0x558] sm:$0xf]
  %v371 = vld [vmem:[%s1 + $0x55c] sm:$0xf]
  %v372 = vld [vmem:[%s1 + $0x560] sm:$0xf]
  %v373 = vld [vmem:[%s1 + $0x564] sm:$0xf]
  %v374 = vld [vmem:[%s1 + $0x568] sm:$0xf]
  %v375 = vld [vmem:[%s1 + $0x56c] sm:$0xf]
  %v376 = vld [vmem:[%s1 + $0x570] sm:$0xf]
  %v377 = vld [vmem:[%s1 + $0x574] sm:$0xf]
  %v378 = vld [vmem:[%s1 + $0x578] sm:$0xf]
  %v379 = vld [vmem:[%s1 + $0x57c] sm:$0xf]
  %v380 = vld [vmem:[%s1 + $0x580] sm:$0xf]
  %v381 = vld [vmem:[%s1 + $0x584] sm:$0xf]
  %v382 = vld [vmem:[%s1 + $0x588] sm:$0xf]
  %v383 = vld [vmem:[%s1 + $0x58c] sm:$0xf]
  %v384 = vld [vmem:[%s1 + $0x590] sm:$0xf]
  %v385 = vld [vmem:[%s1 + $0x594] sm:$0xf]
  %v386 = vld [vmem:[%s1 + $0x598] sm:$0xf]
  %v387 = vld [vmem:[%s1 + $0x59c] sm:$0xf]
  %v388 = vld [vmem:[%s1 + $0x5a0] sm:$0xf]
  %v389 = vld [vmem:[%s1 + $0x5a4] sm:$0xf]
  %v390 = vld [vmem:[%s1 + $0x5a8] sm:$0xf]
  %v391 = vld [vmem:[%s1 + $0x5ac] sm:$0xf]
  %v392 = vld [vmem:[%s1 + $0x5b0] sm:$0xf]
  %v393 = vld [vmem:[%s1 + $0x5b4] sm:$0xf]
  %v394 = vld [vmem:[%s1 + $0x5b8] sm:$0xf]
  %v395 = vld [vmem:[%s1 + $0x5bc] sm:$0xf]
  %v396 = vld [vmem:[%s1 + $0x5c0] sm:$0xf]
  %v397 = vld [vmem:[%s1 + $0x5c4] sm:$0xf]
  %v398 = vld [vmem:[%s1 + $0x5c8] sm:$0xf]
  %v399 = vld [vmem:[%s1 + $0x5cc] sm:$0xf]
  %v400 = vld [vmem:[%s1 + $0x5d0] sm:$0xf]
  %v401 = vld [vmem:[%s1 + $0x5d4] sm:$0xf]
  %v402 = vld [vmem:[%s1 + $0x5d8] sm:$0xf]
  %v403 = vld [vmem:[%s1 + $0x5dc] sm:$0xf]
  %v404 = vld [vmem:[%s1 + $0x5e0] sm:$0xf]
  %v405 = vld [vmem:[%s1 + $0x5e4] sm:$0xf]
  %v406 = vld [vmem:[%s1 + $0x5e8] sm:$0xf]
  %v407 = vld [vmem:[%s1 + $0x5ec] sm:$0xf]
  %v408 = vld [vmem:[%s1 + $0x5f0] sm:$0xf]
  %v409 = vld [vmem:[%s1 + $0x5f4] sm:$0xf]
  %v410 = vld [vmem:[%s1 + $0x5f8] sm:$0xf]
  %v411 = vld [vmem:[%s1 + $0x5fc] sm:$0xf]
  %v412 = vld [vmem:[%s1 + $0x600] sm:$0xf]
  %v413 = vld [vmem:[%s1 + $0x604] sm:$0xf]
  %v414 = vld [vmem:[%s1 + $0x608] sm:$0xf]
  %v415 = vld [vmem:[%s1 + $0x60c] sm:$0xf]
  %v416 = vld [vmem:[%s1 + $0x610] sm:$0xf]
  %v417 = vld [vmem:[%s1 + $0x614] sm:$0xf]
  %v418 = vld [vmem:[%s1 + $0x618] sm:$0xf]
  %v419 = vld [vmem:[%s1 + $0x61c] sm:$0xf]
  %v420 = vld [vmem:[%s2] sm:$0x1]
  %v422 = vlaneseq
  %v423 = vshrl.u32 %v422, 7
  %v424 = vsub.s32 0, %v423
  %v425 = vrot.slane %v420, %v424
  %v440 = vunpack.c.l.b16 %v15
  %v441 = vunpack.c.h.b16 %v15
  %v442 = vunpack.c.l.b16 %v16
  %v443 = vunpack.c.h.b16 %v16
  %v444 = vunpack.c.l.b16 %v17
  %v445 = vunpack.c.h.b16 %v17
  %v446 = vunpack.c.l.b16 %v18
  %v447 = vunpack.c.h.b16 %v18
  %v448 = vunpack.c.l.b16 %v19
  %v449 = vunpack.c.h.b16 %v19
  %v450 = vunpack.c.l.b16 %v20
  %v451 = vunpack.c.h.b16 %v20
  %v452 = vunpack.c.l.b16 %v21
  %v453 = vunpack.c.h.b16 %v21
  %v454 = vunpack.c.l.b16 %v22
  %v455 = vunpack.c.h.b16 %v22
  %v456 = vunpack.c.l.b16 %v23
  %v457 = vunpack.c.h.b16 %v23
  %v458 = vunpack.c.l.b16 %v24
  %v459 = vunpack.c.h.b16 %v24
  %v460 = vunpack.c.l.b16 %v25
  %v461 = vunpack.c.h.b16 %v25
  %v462 = vunpack.c.l.b16 %v26
  %v463 = vunpack.c.h.b16 %v26
  %v464 = vunpack.c.l.b16 %v27
  %v465 = vpack.c.b16 %v440, %v440
  %v466 = vpack.c.b16 %v441, %v441
  %v467 = vpack.c.b16 %v442, %v442
  %v468 = vpack.c.b16 %v443, %v443
  %v469 = vpack.c.b16 %v444, %v444
  %v470 = vpack.c.b16 %v445, %v445
  %v471 = vpack.c.b16 %v446, %v446
  %v472 = vpack.c.b16 %v447, %v447
  %v473 = vpack.c.b16 %v448, %v448
  %v474 = vpack.c.b16 %v449, %v449
  %v475 = vpack.c.b16 %v450, %v450
  %v476 = vpack.c.b16 %v451, %v451
  %v477 = vpack.c.b16 %v452, %v452
  %v478 = vpack.c.b16 %v453, %v453
  %v479 = vpack.c.b16 %v454, %v454
  %v480 = vpack.c.b16 %v455, %v455
  %v481 = vpack.c.b16 %v456, %v456
  %v482 = vpack.c.b16 %v457, %v457
  %v483 = vpack.c.b16 %v458, %v458
  %v484 = vpack.c.b16 %v459, %v459
  %v485 = vpack.c.b16 %v460, %v460
  %v486 = vpack.c.b16 %v461, %v461
  %v487 = vpack.c.b16 %v462, %v462
  %v488 = vpack.c.b16 %v463, %v463
  %v489 = vpack.c.b16 %v464, %v464
  %v906 = vunpack.c.l.b16 %v28
  %v907 = vunpack.c.l.b16 %v29
  %v908 = vunpack.c.l.b16 %v30
  %v909 = vunpack.c.l.b16 %v31
  %v910 = vunpack.c.l.b16 %v32
  %v911 = vunpack.c.l.b16 %v33
  %v912 = vunpack.c.l.b16 %v34
  %v913 = vunpack.c.l.b16 %v35
  %v914 = vunpack.c.l.b16 %v36
  %v915 = vunpack.c.l.b16 %v37
  %v916 = vunpack.c.l.b16 %v38
  %v917 = vunpack.c.l.b16 %v39
  %v918 = vunpack.c.l.b16 %v40
  %v919 = vunpack.c.l.b16 %v41
  %v920 = vunpack.c.l.b16 %v42
  %v921 = vunpack.c.l.b16 %v43
  %v922 = vunpack.c.l.b16 %v44
  %v923 = vunpack.c.l.b16 %v45
  %v924 = vunpack.c.l.b16 %v46
  %v925 = vunpack.c.l.b16 %v47
  %v926 = vunpack.c.l.b16 %v48
  %v927 = vunpack.c.l.b16 %v49
  %v928 = vunpack.c.l.b16 %v50
  %v929 = vunpack.c.l.b16 %v51
  %v930 = vunpack.c.l.b16 %v52
  %v931 = vunpack.c.l.b16 %v53
  %v932 = vunpack.c.l.b16 %v54
  %v933 = vunpack.c.l.b16 %v55
  %v934 = vunpack.c.l.b16 %v56
  %v935 = vunpack.c.l.b16 %v57
  %v936 = vunpack.c.l.b16 %v58
  %v937 = vunpack.c.l.b16 %v59
  %v938 = vunpack.c.l.b16 %v60
  %v939 = vunpack.c.l.b16 %v61
  %v940 = vunpack.c.l.b16 %v62
  %v941 = vunpack.c.l.b16 %v63
  %v942 = vunpack.c.l.b16 %v64
  %v943 = vunpack.c.l.b16 %v65
  %v944 = vunpack.c.l.b16 %v66
  %v945 = vunpack.c.l.b16 %v67
  %v946 = vunpack.c.l.b16 %v68
  %v947 = vunpack.c.l.b16 %v69
  %v948 = vunpack.c.l.b16 %v70
  %v949 = vunpack.c.l.b16 %v71
  %v950 = vunpack.c.l.b16 %v72
  %v951 = vunpack.c.l.b16 %v73
  %v952 = vunpack.c.l.b16 %v74
  %v953 = vunpack.c.l.b16 %v75
  %v954 = vunpack.c.l.b16 %v76
  %v955 = vunpack.c.l.b16 %v77
  %v956 = vunpack.c.l.b16 %v78
  %v957 = vunpack.c.l.b16 %v79
  %v958 = vunpack.c.l.b16 %v80
  %v959 = vunpack.c.l.b16 %v81
  %v960 = vunpack.c.l.b16 %v82
  %v961 = vunpack.c.l.b16 %v83
  %v962 = vunpack.c.l.b16 %v84
  %v963 = vunpack.c.l.b16 %v85
  %v964 = vunpack.c.l.b16 %v86
  %v965 = vunpack.c.l.b16 %v87
  %v966 = vunpack.c.l.b16 %v88
  %v967 = vunpack.c.l.b16 %v89
  %v968 = vunpack.c.l.b16 %v90
  %v969 = vunpack.c.l.b16 %v91
  %v970 = vunpack.c.l.b16 %v92
  %v971 = vunpack.c.l.b16 %v93
  %v972 = vunpack.c.l.b16 %v94
  %v973 = vunpack.c.l.b16 %v95
  %v974 = vunpack.c.l.b16 %v96
  %v975 = vunpack.c.l.b16 %v97
  %v976 = vunpack.c.l.b16 %v98
  %v977 = vunpack.c.l.b16 %v99
  %v978 = vunpack.c.l.b16 %v100
  %v979 = vunpack.c.l.b16 %v101
  %v980 = vunpack.c.l.b16 %v102
  %v981 = vunpack.c.l.b16 %v103
  %v982 = vunpack.c.l.b16 %v104
  %v983 = vunpack.c.l.b16 %v105
  %v984 = vunpack.c.l.b16 %v106
  %v985 = vunpack.c.l.b16 %v107
  %v986 = vunpack.c.l.b16 %v108
  %v987 = vunpack.c.l.b16 %v109
  %v988 = vunpack.c.l.b16 %v110
  %v989 = vunpack.c.l.b16 %v111
  %v990 = vunpack.c.l.b16 %v112
  %v991 = vunpack.c.l.b16 %v113
  %v992 = vunpack.c.l.b16 %v114
  %v993 = vunpack.c.l.b16 %v115
  %v994 = vunpack.c.l.b16 %v116
  %v995 = vunpack.c.l.b16 %v117
  %v996 = vunpack.c.l.b16 %v118
  %v997 = vunpack.c.l.b16 %v119
  %v998 = vunpack.c.l.b16 %v120
  %v999 = vunpack.c.l.b16 %v121
  %v1000 = vunpack.c.l.b16 %v122
  %v1001 = vunpack.c.l.b16 %v123
  %v1002 = vunpack.c.l.b16 %v124
  %v1003 = vunpack.c.l.b16 %v125
  %v1004 = vunpack.c.l.b16 %v126
  %v1005 = vunpack.c.l.b16 %v127
  %v1006 = vunpack.c.l.b16 %v128
  %v1007 = vunpack.c.l.b16 %v129
  %v1008 = vunpack.c.l.b16 %v130
  %v1009 = vunpack.c.l.b16 %v131
  %v1010 = vunpack.c.l.b16 %v132
  %v1011 = vunpack.c.l.b16 %v133
  %v1012 = vunpack.c.l.b16 %v134
  %v1013 = vunpack.c.l.b16 %v135
  %v1014 = vunpack.c.l.b16 %v136
  %v1015 = vunpack.c.l.b16 %v137
  %v1016 = vunpack.c.l.b16 %v138
  %v1017 = vunpack.c.l.b16 %v139
  %v1018 = vunpack.c.l.b16 %v140
  %v1019 = vunpack.c.l.b16 %v141
  %v1020 = vunpack.c.l.b16 %v142
  %v1021 = vunpack.c.l.b16 %v143
  %v1022 = vunpack.c.l.b16 %v144
  %v1023 = vunpack.c.l.b16 %v145
  %v1024 = vunpack.c.l.b16 %v146
  %v1025 = vunpack.c.l.b16 %v147
  %v1026 = vunpack.c.l.b16 %v148
  %v1027 = vunpack.c.l.b16 %v149
  %v1028 = vunpack.c.l.b16 %v150
  %v1029 = vunpack.c.l.b16 %v151
  %v1030 = vunpack.c.l.b16 %v152
  %v1031 = vunpack.c.l.b16 %v153
  %v1032 = vunpack.c.l.b16 %v154
  %v1033 = vunpack.c.l.b16 %v155
  %v1034 = vunpack.c.l.b16 %v156
  %v1035 = vunpack.c.l.b16 %v157
  %v1036 = vunpack.c.l.b16 %v158
  %v1037 = vunpack.c.l.b16 %v159
  %v1038 = vunpack.c.l.b16 %v160
  %v1039 = vunpack.c.l.b16 %v161
  %v1040 = vunpack.c.l.b16 %v162
  %v1041 = vunpack.c.l.b16 %v163
  %v1042 = vunpack.c.l.b16 %v164
  %v1043 = vunpack.c.l.b16 %v165
  %v1044 = vunpack.c.l.b16 %v166
  %v1045 = vunpack.c.l.b16 %v167
  %v1046 = vunpack.c.l.b16 %v168
  %v1047 = vunpack.c.l.b16 %v169
  %v1048 = vunpack.c.l.b16 %v170
  %v1049 = vunpack.c.l.b16 %v171
  %v1050 = vunpack.c.l.b16 %v172
  %v1051 = vunpack.c.l.b16 %v173
  %v1052 = vunpack.c.l.b16 %v174
  %v1053 = vunpack.c.l.b16 %v175
  %v1054 = vunpack.c.l.b16 %v176
  %v1055 = vunpack.c.l.b16 %v177
  %v1056 = vunpack.c.l.b16 %v178
  %v1057 = vunpack.c.l.b16 %v179
  %v1058 = vunpack.c.l.b16 %v180
  %v1059 = vunpack.c.l.b16 %v181
  %v1060 = vunpack.c.l.b16 %v182
  %v1061 = vunpack.c.l.b16 %v183
  %v1062 = vunpack.c.l.b16 %v184
  %v1063 = vunpack.c.l.b16 %v185
  %v1064 = vunpack.c.l.b16 %v186
  %v1065 = vunpack.c.l.b16 %v187
  %v1066 = vunpack.c.l.b16 %v188
  %v1067 = vunpack.c.l.b16 %v189
  %v1068 = vunpack.c.l.b16 %v190
  %v1069 = vunpack.c.l.b16 %v191
  %v1070 = vunpack.c.l.b16 %v192
  %v1071 = vunpack.c.l.b16 %v193
  %v1072 = vunpack.c.l.b16 %v194
  %v1073 = vunpack.c.l.b16 %v195
  %v1074 = vunpack.c.l.b16 %v196
  %v1075 = vunpack.c.l.b16 %v197
  %v1076 = vunpack.c.l.b16 %v198
  %v1077 = vunpack.c.l.b16 %v199
  %v1078 = vunpack.c.l.b16 %v200
  %v1079 = vunpack.c.l.b16 %v201
  %v1080 = vunpack.c.l.b16 %v202
  %v1081 = vunpack.c.l.b16 %v203
  %v1082 = vunpack.c.l.b16 %v204
  %v1083 = vunpack.c.l.b16 %v205
  %v1084 = vunpack.c.l.b16 %v206
  %v1085 = vunpack.c.l.b16 %v207
  %v1086 = vunpack.c.l.b16 %v208
  %v1087 = vunpack.c.l.b16 %v209
  %v1088 = vunpack.c.l.b16 %v210
  %v1089 = vunpack.c.l.b16 %v211
  %v1090 = vunpack.c.l.b16 %v212
  %v1091 = vunpack.c.l.b16 %v213
  %v1092 = vunpack.c.l.b16 %v214
  %v1093 = vunpack.c.l.b16 %v215
  %v1094 = vunpack.c.l.b16 %v216
  %v1095 = vunpack.c.l.b16 %v217
  %v1096 = vunpack.c.l.b16 %v218
  %v1097 = vunpack.c.l.b16 %v219
  %v1098 = vunpack.c.l.b16 %v220
  %v1099 = vunpack.c.l.b16 %v221
  %v1100 = vunpack.c.l.b16 %v222
  %v1101 = vunpack.c.l.b16 %v223
  %v1102 = vunpack.c.l.b16 %v224
  %v1103 = vunpack.c.l.b16 %v225
  %v1104 = vunpack.c.l.b16 %v226
  %v1105 = vunpack.c.l.b16 %v227
  %v1106 = vunpack.c.l.b16 %v228
  %v1107 = vunpack.c.l.b16 %v229
  %v1108 = vunpack.c.l.b16 %v230
  %v1109 = vunpack.c.l.b16 %v231
  %v1110 = vunpack.c.l.b16 %v232
  %v1111 = vunpack.c.l.b16 %v233
  %v1112 = vunpack.c.l.b16 %v234
  %v1113 = vunpack.c.l.b16 %v235
  %v1114 = vunpack.c.l.b16 %v236
  %v1115 = vunpack.c.l.b16 %v237
  %v1116 = vunpack.c.l.b16 %v238
  %v1117 = vunpack.c.l.b16 %v239
  %v1118 = vunpack.c.l.b16 %v240
  %v1119 = vunpack.c.l.b16 %v241
  %v1120 = vunpack.c.l.b16 %v242
  %v1121 = vunpack.c.l.b16 %v243
  %v1122 = vunpack.c.l.b16 %v244
  %v1123 = vunpack.c.l.b16 %v245
  %v1124 = vunpack.c.l.b16 %v246
  %v1125 = vunpack.c.l.b16 %v247
  %v1126 = vunpack.c.l.b16 %v248
  %v1127 = vunpack.c.l.b16 %v249
  %v1128 = vunpack.c.l.b16 %v250
  %v1129 = vunpack.c.l.b16 %v251
  %v1130 = vunpack.c.l.b16 %v252
  %v1131 = vunpack.c.l.b16 %v253
  %v1132 = vunpack.c.l.b16 %v254
  %v1133 = vunpack.c.l.b16 %v255
  %v1134 = vunpack.c.l.b16 %v256
  %v1135 = vunpack.c.l.b16 %v257
  %v1136 = vunpack.c.l.b16 %v258
  %v1137 = vunpack.c.l.b16 %v259
  %v1138 = vunpack.c.l.b16 %v260
  %v1139 = vunpack.c.l.b16 %v261
  %v1140 = vunpack.c.l.b16 %v262
  %v1141 = vunpack.c.l.b16 %v263
  %v1142 = vunpack.c.l.b16 %v264
  %v1143 = vunpack.c.l.b16 %v265
  %v1144 = vunpack.c.l.b16 %v266
  %v1145 = vunpack.c.l.b16 %v267
  %v1146 = vunpack.c.l.b16 %v268
  %v1147 = vunpack.c.l.b16 %v269
  %v1148 = vunpack.c.l.b16 %v270
  %v1149 = vunpack.c.l.b16 %v271
  %v1150 = vunpack.c.l.b16 %v272
  %v1151 = vunpack.c.l.b16 %v273
  %v1152 = vunpack.c.l.b16 %v274
  %v1153 = vunpack.c.l.b16 %v275
  %v1154 = vunpack.c.l.b16 %v276
  %v1155 = vunpack.c.l.b16 %v277
  %v1156 = vunpack.c.l.b16 %v278
  %v1157 = vunpack.c.l.b16 %v279
  %v1158 = vunpack.c.l.b16 %v280
  %v1159 = vunpack.c.l.b16 %v281
  %v1160 = vunpack.c.l.b16 %v282
  %v1161 = vunpack.c.l.b16 %v283
  %v1162 = vunpack.c.l.b16 %v284
  %v1163 = vunpack.c.l.b16 %v285
  %v1164 = vunpack.c.l.b16 %v286
  %v1165 = vunpack.c.l.b16 %v287
  %v1166 = vunpack.c.l.b16 %v288
  %v1167 = vunpack.c.l.b16 %v289
  %v1168 = vunpack.c.l.b16 %v290
  %v1169 = vunpack.c.l.b16 %v291
  %v1170 = vunpack.c.l.b16 %v292
  %v1171 = vunpack.c.l.b16 %v293
  %v1172 = vunpack.c.l.b16 %v294
  %v1173 = vunpack.c.l.b16 %v295
  %v1174 = vunpack.c.l.b16 %v296
  %v1175 = vunpack.c.l.b16 %v297
  %v1176 = vunpack.c.l.b16 %v298
  %v1177 = vunpack.c.l.b16 %v299
  %v1178 = vunpack.c.l.b16 %v300
  %v1179 = vunpack.c.l.b16 %v301
  %v1180 = vunpack.c.l.b16 %v302
  %v1181 = vunpack.c.l.b16 %v303
  %v1182 = vunpack.c.l.b16 %v304
  %v1183 = vunpack.c.l.b16 %v305
  %v1184 = vunpack.c.l.b16 %v306
  %v1185 = vunpack.c.l.b16 %v307
  %v1186 = vunpack.c.l.b16 %v308
  %v1187 = vunpack.c.l.b16 %v309
  %v1188 = vunpack.c.l.b16 %v310
  %v1189 = vunpack.c.l.b16 %v311
  %v1190 = vunpack.c.l.b16 %v312
  %v1191 = vunpack.c.l.b16 %v313
  %v1192 = vunpack.c.l.b16 %v314
  %v1193 = vunpack.c.l.b16 %v315
  %v1194 = vunpack.c.l.b16 %v316
  %v1195 = vunpack.c.l.b16 %v317
  %v1196 = vunpack.c.l.b16 %v318
  %v1197 = vunpack.c.l.b16 %v319
  %v1198 = vunpack.c.l.b16 %v320
  %v1199 = vunpack.c.l.b16 %v321
  %v1200 = vunpack.c.l.b16 %v322
  %v1201 = vunpack.c.l.b16 %v323
  %v1202 = vunpack.c.l.b16 %v324
  %v1203 = vunpack.c.l.b16 %v325
  %v1204 = vunpack.c.l.b16 %v326
  %v1205 = vunpack.c.l.b16 %v327
  %v1206 = vunpack.c.l.b16 %v328
  %v1207 = vunpack.c.l.b16 %v329
  %v1208 = vunpack.c.l.b16 %v330
  %v1209 = vunpack.c.l.b16 %v331
  %v1210 = vunpack.c.l.b16 %v332
  %v1211 = vunpack.c.l.b16 %v333
  %v1212 = vunpack.c.l.b16 %v334
  %v1213 = vunpack.c.l.b16 %v335
  %v1214 = vunpack.c.l.b16 %v336
  %v1215 = vunpack.c.l.b16 %v337
  %v1216 = vunpack.c.l.b16 %v338
  %v1217 = vunpack.c.l.b16 %v339
  %v1218 = vunpack.c.l.b16 %v340
  %v1219 = vunpack.c.l.b16 %v341
  %v1220 = vunpack.c.l.b16 %v342
  %v1221 = vunpack.c.l.b16 %v343
  %v1222 = vunpack.c.l.b16 %v344
  %v1223 = vunpack.c.l.b16 %v345
  %v1224 = vunpack.c.l.b16 %v346
  %v1225 = vunpack.c.l.b16 %v347
  %v1226 = vunpack.c.l.b16 %v348
  %v1227 = vunpack.c.l.b16 %v349
  %v1228 = vunpack.c.l.b16 %v350
  %v1229 = vunpack.c.l.b16 %v351
  %v1230 = vunpack.c.l.b16 %v352
  %v1231 = vunpack.c.l.b16 %v353
  %v1232 = vunpack.c.l.b16 %v354
  %v1233 = vunpack.c.l.b16 %v355
  %v1234 = vunpack.c.l.b16 %v356
  %v1235 = vunpack.c.l.b16 %v357
  %v1236 = vunpack.c.l.b16 %v358
  %v1237 = vunpack.c.l.b16 %v359
  %v1238 = vunpack.c.l.b16 %v360
  %v1239 = vunpack.c.l.b16 %v361
  %v1240 = vunpack.c.l.b16 %v362
  %v1241 = vunpack.c.l.b16 %v363
  %v1242 = vunpack.c.l.b16 %v364
  %v1243 = vunpack.c.l.b16 %v365
  %v1244 = vunpack.c.l.b16 %v366
  %v1245 = vunpack.c.l.b16 %v367
  %v1246 = vunpack.c.l.b16 %v368
  %v1247 = vunpack.c.l.b16 %v369
  %v1248 = vunpack.c.l.b16 %v370
  %v1249 = vunpack.c.l.b16 %v371
  %v1250 = vunpack.c.l.b16 %v372
  %v1251 = vunpack.c.l.b16 %v373
  %v1252 = vunpack.c.l.b16 %v374
  %v1253 = vunpack.c.l.b16 %v375
  %v1254 = vunpack.c.l.b16 %v376
  %v1255 = vunpack.c.l.b16 %v377
  %v1256 = vunpack.c.l.b16 %v378
  %v1257 = vunpack.c.l.b16 %v379
  %v1258 = vunpack.c.l.b16 %v380
  %v1259 = vunpack.c.l.b16 %v381
  %v1260 = vunpack.c.l.b16 %v382
  %v1261 = vunpack.c.l.b16 %v383
  %v1262 = vunpack.c.l.b16 %v384
  %v1263 = vunpack.c.l.b16 %v385
  %v1264 = vunpack.c.l.b16 %v386
  %v1265 = vunpack.c.l.b16 %v387
  %v1266 = vunpack.c.l.b16 %v388
  %v1267 = vunpack.c.l.b16 %v389
  %v1268 = vunpack.c.l.b16 %v390
  %v1269 = vunpack.c.l.b16 %v391
  %v1270 = vunpack.c.l.b16 %v392
  %v1271 = vunpack.c.l.b16 %v393
  %v1272 = vunpack.c.l.b16 %v394
  %v1273 = vunpack.c.l.b16 %v395
  %v1274 = vunpack.c.l.b16 %v396
  %v1275 = vunpack.c.l.b16 %v397
  %v1276 = vunpack.c.l.b16 %v398
  %v1277 = vunpack.c.l.b16 %v399
  %v1278 = vunpack.c.l.b16 %v400
  %v1279 = vunpack.c.l.b16 %v401
  %v1280 = vunpack.c.l.b16 %v402
  %v1281 = vunpack.c.l.b16 %v403
  %v1282 = vunpack.c.l.b16 %v404
  %v1283 = vunpack.c.l.b16 %v405
  %v1284 = vunpack.c.l.b16 %v406
  %v1285 = vunpack.c.l.b16 %v407
  %v1286 = vunpack.c.l.b16 %v408
  %v1287 = vunpack.c.l.b16 %v409
  %v1288 = vunpack.c.l.b16 %v410
  %v1289 = vunpack.c.l.b16 %v411
  %v1290 = vunpack.c.l.b16 %v412
  %v1291 = vunpack.c.l.b16 %v413
  %v1292 = vunpack.c.l.b16 %v414
  %v1293 = vunpack.c.l.b16 %v415
  %v1294 = vunpack.c.l.b16 %v416
  %v1295 = vunpack.c.l.b16 %v417
  %v1296 = vunpack.c.l.b16 %v418
  %v1297 = vunpack.c.l.b16 %v419
  %v1298 = vpack.c.b16 %v907, %v906
  %v1299 = vpack.c.b16 %v909, %v908
  %v1300 = vpack.c.b16 %v911, %v910
  %v1301 = vpack.c.b16 %v913, %v912
  %v1302 = vpack.c.b16 %v915, %v914
  %v1303 = vpack.c.b16 %v917, %v916
  %v1304 = vpack.c.b16 %v919, %v918
  %v1305 = vpack.c.b16 %v921, %v920
  %v1306 = vpack.c.b16 %v923, %v922
  %v1307 = vpack.c.b16 %v925, %v924
  %v1308 = vpack.c.b16 %v927, %v926
  %v1309 = vpack.c.b16 %v929, %v928
  %v1310 = vpack.c.b16 %v931, %v930
  %v1311 = vpack.c.b16 %v933, %v932
  %v1312 = vpack.c.b16 %v935, %v934
  %v1313 = vpack.c.b16 %v937, %v936
  %v1314 = vpack.c.b16 %v939, %v938
  %v1315 = vpack.c.b16 %v941, %v940
  %v1316 = vpack.c.b16 %v943, %v942
  %v1317 = vpack.c.b16 %v945, %v944
  %v1318 = vpack.c.b16 %v947, %v946
  %v1319 = vpack.c.b16 %v949, %v948
  %v1320 = vpack.c.b16 %v951, %v950
  %v1321 = vpack.c.b16 %v953, %v952
  %v1322 = vpack.c.b16 %v955, %v954
  %v1323 = vpack.c.b16 %v957, %v956
  %v1324 = vpack.c.b16 %v959, %v958
  %v1325 = vpack.c.b16 %v961, %v960
  %v1326 = vpack.c.b16 %v963, %v962
  %v1327 = vpack.c.b16 %v965, %v964
  %v1328 = vpack.c.b16 %v967, %v966
  %v1329 = vpack.c.b16 %v969, %v968
  %v1330 = vpack.c.b16 %v971, %v970
  %v1331 = vpack.c.b16 %v973, %v972
  %v1332 = vpack.c.b16 %v975, %v974
  %v1333 = vpack.c.b16 %v977, %v976
  %v1334 = vpack.c.b16 %v979, %v978
  %v1335 = vpack.c.b16 %v981, %v980
  %v1336 = vpack.c.b16 %v983, %v982
  %v1337 = vpack.c.b16 %v985, %v984
  %v1338 = vpack.c.b16 %v987, %v986
  %v1339 = vpack.c.b16 %v989, %v988
  %v1340 = vpack.c.b16 %v991, %v990
  %v1341 = vpack.c.b16 %v993, %v992
  %v1342 = vpack.c.b16 %v995, %v994
  %v1343 = vpack.c.b16 %v997, %v996
  %v1344 = vpack.c.b16 %v999, %v998
  %v1345 = vpack.c.b16 %v1001, %v1000
  %v1346 = vpack.c.b16 %v1003, %v1002
  %v1347 = vpack.c.b16 %v1005, %v1004
  %v1348 = vpack.c.b16 %v1007, %v1006
  %v1349 = vpack.c.b16 %v1009, %v1008
  %v1350 = vpack.c.b16 %v1011, %v1010
  %v1351 = vpack.c.b16 %v1013, %v1012
  %v1352 = vpack.c.b16 %v1015, %v1014
  %v1353 = vpack.c.b16 %v1017, %v1016
  %v1354 = vpack.c.b16 %v1019, %v1018
  %v1355 = vpack.c.b16 %v1021, %v1020
  %v1356 = vpack.c.b16 %v1023, %v1022
  %v1357 = vpack.c.b16 %v1025, %v1024
  %v1358 = vpack.c.b16 %v1027, %v1026
  %v1359 = vpack.c.b16 %v1029, %v1028
  %v1360 = vpack.c.b16 %v1031, %v1030
  %v1361 = vpack.c.b16 %v1033, %v1032
  %v1362 = vpack.c.b16 %v1035, %v1034
  %v1363 = vpack.c.b16 %v1037, %v1036
  %v1364 = vpack.c.b16 %v1039, %v1038
  %v1365 = vpack.c.b16 %v1041, %v1040
  %v1366 = vpack.c.b16 %v1043, %v1042
  %v1367 = vpack.c.b16 %v1045, %v1044
  %v1368 = vpack.c.b16 %v1047, %v1046
  %v1369 = vpack.c.b16 %v1049, %v1048
  %v1370 = vpack.c.b16 %v1051, %v1050
  %v1371 = vpack.c.b16 %v1053, %v1052
  %v1372 = vpack.c.b16 %v1055, %v1054
  %v1373 = vpack.c.b16 %v1057, %v1056
  %v1374 = vpack.c.b16 %v1059, %v1058
  %v1375 = vpack.c.b16 %v1061, %v1060
  %v1376 = vpack.c.b16 %v1063, %v1062
  %v1377 = vpack.c.b16 %v1065, %v1064
  %v1378 = vpack.c.b16 %v1067, %v1066
  %v1379 = vpack.c.b16 %v1069, %v1068
  %v1380 = vpack.c.b16 %v1071, %v1070
  %v1381 = vpack.c.b16 %v1073, %v1072
  %v1382 = vpack.c.b16 %v1075, %v1074
  %v1383 = vpack.c.b16 %v1077, %v1076
  %v1384 = vpack.c.b16 %v1079, %v1078
  %v1385 = vpack.c.b16 %v1081, %v1080
  %v1386 = vpack.c.b16 %v1083, %v1082
  %v1387 = vpack.c.b16 %v1085, %v1084
  %v1388 = vpack.c.b16 %v1087, %v1086
  %v1389 = vpack.c.b16 %v1089, %v1088
  %v1390 = vpack.c.b16 %v1091, %v1090
  %v1391 = vpack.c.b16 %v1093, %v1092
  %v1392 = vpack.c.b16 %v1095, %v1094
  %v1393 = vpack.c.b16 %v1097, %v1096
  %v1394 = vpack.c.b16 %v1099, %v1098
  %v1395 = vpack.c.b16 %v1101, %v1100
  %v1396 = vpack.c.b16 %v1103, %v1102
  %v1397 = vpack.c.b16 %v1105, %v1104
  %v1398 = vpack.c.b16 %v1107, %v1106
  %v1399 = vpack.c.b16 %v1109, %v1108
  %v1400 = vpack.c.b16 %v1111, %v1110
  %v1401 = vpack.c.b16 %v1113, %v1112
  %v1402 = vpack.c.b16 %v1115, %v1114
  %v1403 = vpack.c.b16 %v1117, %v1116
  %v1404 = vpack.c.b16 %v1119, %v1118
  %v1405 = vpack.c.b16 %v1121, %v1120
  %v1406 = vpack.c.b16 %v1123, %v1122
  %v1407 = vpack.c.b16 %v1125, %v1124
  %v1408 = vpack.c.b16 %v1127, %v1126
  %v1409 = vpack.c.b16 %v1129, %v1128
  %v1410 = vpack.c.b16 %v1131, %v1130
  %v1411 = vpack.c.b16 %v1133, %v1132
  %v1412 = vpack.c.b16 %v1135, %v1134
  %v1413 = vpack.c.b16 %v1137, %v1136
  %v1414 = vpack.c.b16 %v1139, %v1138
  %v1415 = vpack.c.b16 %v1141, %v1140
  %v1416 = vpack.c.b16 %v1143, %v1142
  %v1417 = vpack.c.b16 %v1145, %v1144
  %v1418 = vpack.c.b16 %v1147, %v1146
  %v1419 = vpack.c.b16 %v1149, %v1148
  %v1420 = vpack.c.b16 %v1151, %v1150
  %v1421 = vpack.c.b16 %v1153, %v1152
  %v1422 = vpack.c.b16 %v1155, %v1154
  %v1423 = vpack.c.b16 %v1157, %v1156
  %v1424 = vpack.c.b16 %v1159, %v1158
  %v1425 = vpack.c.b16 %v1161, %v1160
  %v1426 = vpack.c.b16 %v1163, %v1162
  %v1427 = vpack.c.b16 %v1165, %v1164
  %v1428 = vpack.c.b16 %v1167, %v1166
  %v1429 = vpack.c.b16 %v1169, %v1168
  %v1430 = vpack.c.b16 %v1171, %v1170
  %v1431 = vpack.c.b16 %v1173, %v1172
  %v1432 = vpack.c.b16 %v1175, %v1174
  %v1433 = vpack.c.b16 %v1177, %v1176
  %v1434 = vpack.c.b16 %v1179, %v1178
  %v1435 = vpack.c.b16 %v1181, %v1180
  %v1436 = vpack.c.b16 %v1183, %v1182
  %v1437 = vpack.c.b16 %v1185, %v1184
  %v1438 = vpack.c.b16 %v1187, %v1186
  %v1439 = vpack.c.b16 %v1189, %v1188
  %v1440 = vpack.c.b16 %v1191, %v1190
  %v1441 = vpack.c.b16 %v1193, %v1192
  %v1442 = vpack.c.b16 %v1195, %v1194
  %v1443 = vpack.c.b16 %v1197, %v1196
  %v1444 = vpack.c.b16 %v1199, %v1198
  %v1445 = vpack.c.b16 %v1201, %v1200
  %v1446 = vpack.c.b16 %v1203, %v1202
  %v1447 = vpack.c.b16 %v1205, %v1204
  %v1448 = vpack.c.b16 %v1207, %v1206
  %v1449 = vpack.c.b16 %v1209, %v1208
  %v1450 = vpack.c.b16 %v1211, %v1210
  %v1451 = vpack.c.b16 %v1213, %v1212
  %v1452 = vpack.c.b16 %v1215, %v1214
  %v1453 = vpack.c.b16 %v1217, %v1216
  %v1454 = vpack.c.b16 %v1219, %v1218
  %v1455 = vpack.c.b16 %v1221, %v1220
  %v1456 = vpack.c.b16 %v1223, %v1222
  %v1457 = vpack.c.b16 %v1225, %v1224
  %v1458 = vpack.c.b16 %v1227, %v1226
  %v1459 = vpack.c.b16 %v1229, %v1228
  %v1460 = vpack.c.b16 %v1231, %v1230
  %v1461 = vpack.c.b16 %v1233, %v1232
  %v1462 = vpack.c.b16 %v1235, %v1234
  %v1463 = vpack.c.b16 %v1237, %v1236
  %v1464 = vpack.c.b16 %v1239, %v1238
  %v1465 = vpack.c.b16 %v1241, %v1240
  %v1466 = vpack.c.b16 %v1243, %v1242
  %v1467 = vpack.c.b16 %v1245, %v1244
  %v1468 = vpack.c.b16 %v1247, %v1246
  %v1469 = vpack.c.b16 %v1249, %v1248
  %v1470 = vpack.c.b16 %v1251, %v1250
  %v1471 = vpack.c.b16 %v1253, %v1252
  %v1472 = vpack.c.b16 %v1255, %v1254
  %v1473 = vpack.c.b16 %v1257, %v1256
  %v1474 = vpack.c.b16 %v1259, %v1258
  %v1475 = vpack.c.b16 %v1261, %v1260
  %v1476 = vpack.c.b16 %v1263, %v1262
  %v1477 = vpack.c.b16 %v1265, %v1264
  %v1478 = vpack.c.b16 %v1267, %v1266
  %v1479 = vpack.c.b16 %v1269, %v1268
  %v1480 = vpack.c.b16 %v1271, %v1270
  %v1481 = vpack.c.b16 %v1273, %v1272
  %v1482 = vpack.c.b16 %v1275, %v1274
  %v1483 = vpack.c.b16 %v1277, %v1276
  %v1484 = vpack.c.b16 %v1279, %v1278
  %v1485 = vpack.c.b16 %v1281, %v1280
  %v1486 = vpack.c.b16 %v1283, %v1282
  %v1487 = vpack.c.b16 %v1285, %v1284
  %v1488 = vpack.c.b16 %v1287, %v1286
  %v1489 = vpack.c.b16 %v1289, %v1288
  %v1490 = vpack.c.b16 %v1291, %v1290
  %v1491 = vpack.c.b16 %v1293, %v1292
  %v1492 = vpack.c.b16 %v1295, %v1294
  %v1493 = vpack.c.b16 %v1297, %v1296
  %vm1690 = vcmask 523264
  %v1692 = vsel %vm1690, %v489, 0
  %1694 = vmatprep.subr.bf16.mxu0 0
  %1695 = vmatpush1.bf16.msra.mxu0 %v1298
  %1696 = vmatprep.subr.bf16.mxu0 0
  %1697 = vmatpush1.bf16.msra.mxu0 %v1299
  %1698 = vmatprep.subr.bf16.mxu0 0
  %1699 = vmatpush1.bf16.msra.mxu0 %v1300
  %1700 = vmatprep.subr.bf16.mxu0 0
  %1701 = vmatpush1.bf16.msra.mxu0 %v1301
  %1702 = vmatprep.subr.bf16.mxu0 0
  %1703 = vmatpush1.bf16.msra.mxu0 %v1302
  %1704 = vmatprep.subr.bf16.mxu0 0
  %1705 = vmatpush1.bf16.msra.mxu0 %v1303
  %1706 = vmatprep.subr.bf16.mxu0 0
  %1707 = vmatpush1.bf16.msra.mxu0 %v1304
  %1708 = vmatprep.subr.bf16.mxu0 0
  %1709 = vmatpush1.bf16.msra.mxu0 %v1305
  %1710 = vmatprep.subr.bf16.mxu0 0
  %1711 = vmatpush1.bf16.msra.mxu0 %v1306
  %1712 = vmatprep.subr.bf16.mxu0 0
  %1713 = vmatpush1.bf16.msra.mxu0 %v1307
  %1714 = vmatprep.subr.bf16.mxu0 0
  %1715 = vmatpush1.bf16.msra.mxu0 %v1308
  %1716 = vmatprep.subr.bf16.mxu0 0
  %1717 = vmatpush1.bf16.msra.mxu0 %v1309
  %1718 = vmatprep.subr.bf16.mxu0 0
  %1719 = vmatpush1.bf16.msra.mxu0 %v1310
  %1720 = vmatprep.subr.bf16.mxu0 0
  %1721 = vmatpush1.bf16.msra.mxu0 %v1311
  %1722 = vmatprep.subr.bf16.mxu0 0
  %1723 = vmatpush1.bf16.msra.mxu0 %v1312
  %1724 = vmatprep.subr.bf16.mxu0 0
  %1725 = vmatpush1.bf16.msra.mxu0 %v1313
  %1726 = vmatprep.mubr.bf16.mxu0 %v466
  %1727 = vmatmul.mubr.bf16.gmra.mrb[0].mxu0 %v465
  %v1728 = vpop.f32.mrb[0].mxu0
  %v1729 = vadd.f32 %v425, %v1728
  %v1730 = vpop.f32.mrb[0].mxu0
  %v1731 = vpop.f32.mrb[0].mxu0
  %v1732 = vpop.f32.mrb[0].mxu0
  %1733 = vdwg.mxu0
  %1734 = vmatprep.subr.bf16.mxu0 0
  %1735 = vmatpush1.bf16.msra.mxu0 %v1314
  %1736 = vmatprep.subr.bf16.mxu0 0
  %1737 = vmatpush1.bf16.msra.mxu0 %v1315
  %1738 = vmatprep.subr.bf16.mxu0 0
  %1739 = vmatpush1.bf16.msra.mxu0 %v1316
  %1740 = vmatprep.subr.bf16.mxu0 0
  %1741 = vmatpush1.bf16.msra.mxu0 %v1317
  %1742 = vmatprep.subr.bf16.mxu0 0
  %1743 = vmatpush1.bf16.msra.mxu0 %v1318
  %1744 = vmatprep.subr.bf16.mxu0 0
  %1745 = vmatpush1.bf16.msra.mxu0 %v1319
  %1746 = vmatprep.subr.bf16.mxu0 0
  %1747 = vmatpush1.bf16.msra.mxu0 %v1320
  %1748 = vmatprep.subr.bf16.mxu0 0
  %1749 = vmatpush1.bf16.msra.mxu0 %v1321
  %1750 = vmatprep.subr.bf16.mxu0 0
  %1751 = vmatpush1.bf16.msra.mxu0 %v1322
  %1752 = vmatprep.subr.bf16.mxu0 0
  %1753 = vmatpush1.bf16.msra.mxu0 %v1323
  %1754 = vmatprep.subr.bf16.mxu0 0
  %1755 = vmatpush1.bf16.msra.mxu0 %v1324
  %1756 = vmatprep.subr.bf16.mxu0 0
  %1757 = vmatpush1.bf16.msra.mxu0 %v1325
  %1758 = vmatprep.subr.bf16.mxu0 0
  %1759 = vmatpush1.bf16.msra.mxu0 %v1326
  %1760 = vmatprep.subr.bf16.mxu0 0
  %1761 = vmatpush1.bf16.msra.mxu0 %v1327
  %1762 = vmatprep.subr.bf16.mxu0 0
  %1763 = vmatpush1.bf16.msra.mxu0 %v1328
  %1764 = vmatprep.subr.bf16.mxu0 0
  %1765 = vmatpush1.bf16.msra.mxu0 %v1329
  %1766 = vmatprep.mubr.bf16.mxu0 %v468
  %1767 = vmatmul.mubr.bf16.gmra.mrb[0].mxu0 %v467
  %v1768 = vpop.f32.mrb[0].mxu0
  %v1769 = vadd.f32 %v1729, %v1768
  %v1770 = vpop.f32.mrb[0].mxu0
  %v1771 = vpop.f32.mrb[0].mxu0
  %v1772 = vpop.f32.mrb[0].mxu0
  %1773 = vdwg.mxu0
  %1774 = vmatprep.subr.bf16.mxu0 0
  %1775 = vmatpush1.bf16.msra.mxu0 %v1330
  %1776 = vmatprep.subr.bf16.mxu0 0
  %1777 = vmatpush1.bf16.msra.mxu0 %v1331
  %1778 = vmatprep.subr.bf16.mxu0 0
  %1779 = vmatpush1.bf16.msra.mxu0 %v1332
  %1780 = vmatprep.subr.bf16.mxu0 0
  %1781 = vmatpush1.bf16.msra.mxu0 %v1333
  %1782 = vmatprep.subr.bf16.mxu0 0
  %1783 = vmatpush1.bf16.msra.mxu0 %v1334
  %1784 = vmatprep.subr.bf16.mxu0 0
  %1785 = vmatpush1.bf16.msra.mxu0 %v1335
  %1786 = vmatprep.subr.bf16.mxu0 0
  %1787 = vmatpush1.bf16.msra.mxu0 %v1336
  %1788 = vmatprep.subr.bf16.mxu0 0
  %1789 = vmatpush1.bf16.msra.mxu0 %v1337
  %1790 = vmatprep.subr.bf16.mxu0 0
  %1791 = vmatpush1.bf16.msra.mxu0 %v1338
  %1792 = vmatprep.subr.bf16.mxu0 0
  %1793 = vmatpush1.bf16.msra.mxu0 %v1339
  %1794 = vmatprep.subr.bf16.mxu0 0
  %1795 = vmatpush1.bf16.msra.mxu0 %v1340
  %1796 = vmatprep.subr.bf16.mxu0 0
  %1797 = vmatpush1.bf16.msra.mxu0 %v1341
  %1798 = vmatprep.subr.bf16.mxu0 0
  %1799 = vmatpush1.bf16.msra.mxu0 %v1342
  %1800 = vmatprep.subr.bf16.mxu0 0
  %1801 = vmatpush1.bf16.msra.mxu0 %v1343
  %1802 = vmatprep.subr.bf16.mxu0 0
  %1803 = vmatpush1.bf16.msra.mxu0 %v1344
  %1804 = vmatprep.subr.bf16.mxu0 0
  %1805 = vmatpush1.bf16.msra.mxu0 %v1345
  %1806 = vmatprep.mubr.bf16.mxu0 %v470
  %1807 = vmatmul.mubr.bf16.gmra.mrb[0].mxu0 %v469
  %v1808 = vpop.f32.mrb[0].mxu0
  %v1809 = vadd.f32 %v1769, %v1808
  %v1810 = vpop.f32.mrb[0].mxu0
  %v1811 = vpop.f32.mrb[0].mxu0
  %v1812 = vpop.f32.mrb[0].mxu0
  %1813 = vdwg.mxu0
  %1814 = vmatprep.subr.bf16.mxu0 0
  %1815 = vmatpush1.bf16.msra.mxu0 %v1346
  %1816 = vmatprep.subr.bf16.mxu0 0
  %1817 = vmatpush1.bf16.msra.mxu0 %v1347
  %1818 = vmatprep.subr.bf16.mxu0 0
  %1819 = vmatpush1.bf16.msra.mxu0 %v1348
  %1820 = vmatprep.subr.bf16.mxu0 0
  %1821 = vmatpush1.bf16.msra.mxu0 %v1349
  %1822 = vmatprep.subr.bf16.mxu0 0
  %1823 = vmatpush1.bf16.msra.mxu0 %v1350
  %1824 = vmatprep.subr.bf16.mxu0 0
  %1825 = vmatpush1.bf16.msra.mxu0 %v1351
  %1826 = vmatprep.subr.bf16.mxu0 0
  %1827 = vmatpush1.bf16.msra.mxu0 %v1352
  %1828 = vmatprep.subr.bf16.mxu0 0
  %1829 = vmatpush1.bf16.msra.mxu0 %v1353
  %1830 = vmatprep.subr.bf16.mxu0 0
  %1831 = vmatpush1.bf16.msra.mxu0 %v1354
  %1832 = vmatprep.subr.bf16.mxu0 0
  %1833 = vmatpush1.bf16.msra.mxu0 %v1355
  %1834 = vmatprep.subr.bf16.mxu0 0
  %1835 = vmatpush1.bf16.msra.mxu0 %v1356
  %1836 = vmatprep.subr.bf16.mxu0 0
  %1837 = vmatpush1.bf16.msra.mxu0 %v1357
  %1838 = vmatprep.subr.bf16.mxu0 0
  %1839 = vmatpush1.bf16.msra.mxu0 %v1358
  %1840 = vmatprep.subr.bf16.mxu0 0
  %1841 = vmatpush1.bf16.msra.mxu0 %v1359
  %1842 = vmatprep.subr.bf16.mxu0 0
  %1843 = vmatpush1.bf16.msra.mxu0 %v1360
  %1844 = vmatprep.subr.bf16.mxu0 0
  %1845 = vmatpush1.bf16.msra.mxu0 %v1361
  %1846 = vmatprep.mubr.bf16.mxu0 %v472
  %1847 = vmatmul.mubr.bf16.gmra.mrb[0].mxu0 %v471
  %v1848 = vpop.f32.mrb[0].mxu0
  %v1849 = vadd.f32 %v1809, %v1848
  %v1850 = vpop.f32.mrb[0].mxu0
  %v1851 = vpop.f32.mrb[0].mxu0
  %v1852 = vpop.f32.mrb[0].mxu0
  %1853 = vdwg.mxu0
  %1854 = vmatprep.subr.bf16.mxu0 0
  %1855 = vmatpush1.bf16.msra.mxu0 %v1362
  %1856 = vmatprep.subr.bf16.mxu0 0
  %1857 = vmatpush1.bf16.msra.mxu0 %v1363
  %1858 = vmatprep.subr.bf16.mxu0 0
  %1859 = vmatpush1.bf16.msra.mxu0 %v1364
  %1860 = vmatprep.subr.bf16.mxu0 0
  %1861 = vmatpush1.bf16.msra.mxu0 %v1365
  %1862 = vmatprep.subr.bf16.mxu0 0
  %1863 = vmatpush1.bf16.msra.mxu0 %v1366
  %1864 = vmatprep.subr.bf16.mxu0 0
  %1865 = vmatpush1.bf16.msra.mxu0 %v1367
  %1866 = vmatprep.subr.bf16.mxu0 0
  %1867 = vmatpush1.bf16.msra.mxu0 %v1368
  %1868 = vmatprep.subr.bf16.mxu0 0
  %1869 = vmatpush1.bf16.msra.mxu0 %v1369
  %1870 = vmatprep.subr.bf16.mxu0 0
  %1871 = vmatpush1.bf16.msra.mxu0 %v1370
  %1872 = vmatprep.subr.bf16.mxu0 0
  %1873 = vmatpush1.bf16.msra.mxu0 %v1371
  %1874 = vmatprep.subr.bf16.mxu0 0
  %1875 = vmatpush1.bf16.msra.mxu0 %v1372
  %1876 = vmatprep.subr.bf16.mxu0 0
  %1877 = vmatpush1.bf16.msra.mxu0 %v1373
  %1878 = vmatprep.subr.bf16.mxu0 0
  %1879 = vmatpush1.bf16.msra.mxu0 %v1374
  %1880 = vmatprep.subr.bf16.mxu0 0
  %1881 = vmatpush1.bf16.msra.mxu0 %v1375
  %1882 = vmatprep.subr.bf16.mxu0 0
  %1883 = vmatpush1.bf16.msra.mxu0 %v1376
  %1884 = vmatprep.subr.bf16.mxu0 0
  %1885 = vmatpush1.bf16.msra.mxu0 %v1377
  %1886 = vmatprep.mubr.bf16.mxu0 %v474
  %1887 = vmatmul.mubr.bf16.gmra.mrb[0].mxu0 %v473
  %v1888 = vpop.f32.mrb[0].mxu0
  %v1889 = vadd.f32 %v1849, %v1888
  %v1890 = vpop.f32.mrb[0].mxu0
  %v1891 = vpop.f32.mrb[0].mxu0
  %v1892 = vpop.f32.mrb[0].mxu0
  %1893 = vdwg.mxu0
  %1894 = vmatprep.subr.bf16.mxu0 0
  %1895 = vmatpush1.bf16.msra.mxu0 %v1378
  %1896 = vmatprep.subr.bf16.mxu0 0
  %1897 = vmatpush1.bf16.msra.mxu0 %v1379
  %1898 = vmatprep.subr.bf16.mxu0 0
  %1899 = vmatpush1.bf16.msra.mxu0 %v1380
  %1900 = vmatprep.subr.bf16.mxu0 0
  %1901 = vmatpush1.bf16.msra.mxu0 %v1381
  %1902 = vmatprep.subr.bf16.mxu0 0
  %1903 = vmatpush1.bf16.msra.mxu0 %v1382
  %1904 = vmatprep.subr.bf16.mxu0 0
  %1905 = vmatpush1.bf16.msra.mxu0 %v1383
  %1906 = vmatprep.subr.bf16.mxu0 0
  %1907 = vmatpush1.bf16.msra.mxu0 %v1384
  %1908 = vmatprep.subr.bf16.mxu0 0
  %1909 = vmatpush1.bf16.msra.mxu0 %v1385
  %1910 = vmatprep.subr.bf16.mxu0 0
  %1911 = vmatpush1.bf16.msra.mxu0 %v1386
  %1912 = vmatprep.subr.bf16.mxu0 0
  %1913 = vmatpush1.bf16.msra.mxu0 %v1387
  %1914 = vmatprep.subr.bf16.mxu0 0
  %1915 = vmatpush1.bf16.msra.mxu0 %v1388
  %1916 = vmatprep.subr.bf16.mxu0 0
  %1917 = vmatpush1.bf16.msra.mxu0 %v1389
  %1918 = vmatprep.subr.bf16.mxu0 0
  %1919 = vmatpush1.bf16.msra.mxu0 %v1390
  %1920 = vmatprep.subr.bf16.mxu0 0
  %1921 = vmatpush1.bf16.msra.mxu0 %v1391
  %1922 = vmatprep.subr.bf16.mxu0 0
  %1923 = vmatpush1.bf16.msra.mxu0 %v1392
  %1924 = vmatprep.subr.bf16.mxu0 0
  %1925 = vmatpush1.bf16.msra.mxu0 %v1393
  %1926 = vmatprep.mubr.bf16.mxu0 %v476
  %1927 = vmatmul.mubr.bf16.gmra.mrb[0].mxu0 %v475
  %v1928 = vpop.f32.mrb[0].mxu0
  %v1929 = vadd.f32 %v1889, %v1928
  %v1930 = vpop.f32.mrb[0].mxu0
  %v1931 = vpop.f32.mrb[0].mxu0
  %v1932 = vpop.f32.mrb[0].mxu0
  %1933 = vdwg.mxu0
  %1934 = vmatprep.subr.bf16.mxu0 0
  %1935 = vmatpush1.bf16.msra.mxu0 %v1394
  %1936 = vmatprep.subr.bf16.mxu0 0
  %1937 = vmatpush1.bf16.msra.mxu0 %v1395
  %1938 = vmatprep.subr.bf16.mxu0 0
  %1939 = vmatpush1.bf16.msra.mxu0 %v1396
  %1940 = vmatprep.subr.bf16.mxu0 0
  %1941 = vmatpush1.bf16.msra.mxu0 %v1397
  %1942 = vmatprep.subr.bf16.mxu0 0
  %1943 = vmatpush1.bf16.msra.mxu0 %v1398
  %1944 = vmatprep.subr.bf16.mxu0 0
  %1945 = vmatpush1.bf16.msra.mxu0 %v1399
  %1946 = vmatprep.subr.bf16.mxu0 0
  %1947 = vmatpush1.bf16.msra.mxu0 %v1400
  %1948 = vmatprep.subr.bf16.mxu0 0
  %1949 = vmatpush1.bf16.msra.mxu0 %v1401
  %1950 = vmatprep.subr.bf16.mxu0 0
  %1951 = vmatpush1.bf16.msra.mxu0 %v1402
  %1952 = vmatprep.subr.bf16.mxu0 0
  %1953 = vmatpush1.bf16.msra.mxu0 %v1403
  %1954 = vmatprep.subr.bf16.mxu0 0
  %1955 = vmatpush1.bf16.msra.mxu0 %v1404
  %1956 = vmatprep.subr.bf16.mxu0 0
  %1957 = vmatpush1.bf16.msra.mxu0 %v1405
  %1958 = vmatprep.subr.bf16.mxu0 0
  %1959 = vmatpush1.bf16.msra.mxu0 %v1406
  %1960 = vmatprep.subr.bf16.mxu0 0
  %1961 = vmatpush1.bf16.msra.mxu0 %v1407
  %1962 = vmatprep.subr.bf16.mxu0 0
  %1963 = vmatpush1.bf16.msra.mxu0 %v1408
  %1964 = vmatprep.subr.bf16.mxu0 0
  %1965 = vmatpush1.bf16.msra.mxu0 %v1409
  %1966 = vmatprep.mubr.bf16.mxu0 %v478
  %1967 = vmatmul.mubr.bf16.gmra.mrb[0].mxu0 %v477
  %v1968 = vpop.f32.mrb[0].mxu0
  %v1969 = vadd.f32 %v1929, %v1968
  %v1970 = vpop.f32.mrb[0].mxu0
  %v1971 = vpop.f32.mrb[0].mxu0
  %v1972 = vpop.f32.mrb[0].mxu0
  %1973 = vdwg.mxu0
  %1974 = vmatprep.subr.bf16.mxu0 0
  %1975 = vmatpush1.bf16.msra.mxu0 %v1410
  %1976 = vmatprep.subr.bf16.mxu0 0
  %1977 = vmatpush1.bf16.msra.mxu0 %v1411
  %1978 = vmatprep.subr.bf16.mxu0 0
  %1979 = vmatpush1.bf16.msra.mxu0 %v1412
  %1980 = vmatprep.subr.bf16.mxu0 0
  %1981 = vmatpush1.bf16.msra.mxu0 %v1413
  %1982 = vmatprep.subr.bf16.mxu0 0
  %1983 = vmatpush1.bf16.msra.mxu0 %v1414
  %1984 = vmatprep.subr.bf16.mxu0 0
  %1985 = vmatpush1.bf16.msra.mxu0 %v1415
  %1986 = vmatprep.subr.bf16.mxu0 0
  %1987 = vmatpush1.bf16.msra.mxu0 %v1416
  %1988 = vmatprep.subr.bf16.mxu0 0
  %1989 = vmatpush1.bf16.msra.mxu0 %v1417
  %1990 = vmatprep.subr.bf16.mxu0 0
  %1991 = vmatpush1.bf16.msra.mxu0 %v1418
  %1992 = vmatprep.subr.bf16.mxu0 0
  %1993 = vmatpush1.bf16.msra.mxu0 %v1419
  %1994 = vmatprep.subr.bf16.mxu0 0
  %1995 = vmatpush1.bf16.msra.mxu0 %v1420
  %1996 = vmatprep.subr.bf16.mxu0 0
  %1997 = vmatpush1.bf16.msra.mxu0 %v1421
  %1998 = vmatprep.subr.bf16.mxu0 0
  %1999 = vmatpush1.bf16.msra.mxu0 %v1422
  %2000 = vmatprep.subr.bf16.mxu0 0
  %2001 = vmatpush1.bf16.msra.mxu0 %v1423
  %2002 = vmatprep.subr.bf16.mxu0 0
  %2003 = vmatpush1.bf16.msra.mxu0 %v1424
  %2004 = vmatprep.subr.bf16.mxu0 0
  %2005 = vmatpush1.bf16.msra.mxu0 %v1425
  %2006 = vmatprep.mubr.bf16.mxu0 %v480
  %2007 = vmatmul.mubr.bf16.gmra.mrb[0].mxu0 %v479
  %v2008 = vpop.f32.mrb[0].mxu0
  %v2009 = vadd.f32 %v1969, %v2008
  %v2010 = vpop.f32.mrb[0].mxu0
  %v2011 = vpop.f32.mrb[0].mxu0
  %v2012 = vpop.f32.mrb[0].mxu0
  %2013 = vdwg.mxu0
  %2014 = vmatprep.subr.bf16.mxu0 0
  %2015 = vmatpush1.bf16.msra.mxu0 %v1426
  %2016 = vmatprep.subr.bf16.mxu0 0
  %2017 = vmatpush1.bf16.msra.mxu0 %v1427
  %2018 = vmatprep.subr.bf16.mxu0 0
  %2019 = vmatpush1.bf16.msra.mxu0 %v1428
  %2020 = vmatprep.subr.bf16.mxu0 0
  %2021 = vmatpush1.bf16.msra.mxu0 %v1429
  %2022 = vmatprep.subr.bf16.mxu0 0
  %2023 = vmatpush1.bf16.msra.mxu0 %v1430
  %2024 = vmatprep.subr.bf16.mxu0 0
  %2025 = vmatpush1.bf16.msra.mxu0 %v1431
  %2026 = vmatprep.subr.bf16.mxu0 0
  %2027 = vmatpush1.bf16.msra.mxu0 %v1432
  %2028 = vmatprep.subr.bf16.mxu0 0
  %2029 = vmatpush1.bf16.msra.mxu0 %v1433
  %2030 = vmatprep.subr.bf16.mxu0 0
  %2031 = vmatpush1.bf16.msra.mxu0 %v1434
  %2032 = vmatprep.subr.bf16.mxu0 0
  %2033 = vmatpush1.bf16.msra.mxu0 %v1435
  %2034 = vmatprep.subr.bf16.mxu0 0
  %2035 = vmatpush1.bf16.msra.mxu0 %v1436
  %2036 = vmatprep.subr.bf16.mxu0 0
  %2037 = vmatpush1.bf16.msra.mxu0 %v1437
  %2038 = vmatprep.subr.bf16.mxu0 0
  %2039 = vmatpush1.bf16.msra.mxu0 %v1438
  %2040 = vmatprep.subr.bf16.mxu0 0
  %2041 = vmatpush1.bf16.msra.mxu0 %v1439
  %2042 = vmatprep.subr.bf16.mxu0 0
  %2043 = vmatpush1.bf16.msra.mxu0 %v1440
  %2044 = vmatprep.subr.bf16.mxu0 0
  %2045 = vmatpush1.bf16.msra.mxu0 %v1441
  %2046 = vmatprep.mubr.bf16.mxu0 %v482
  %2047 = vmatmul.mubr.bf16.gmra.mrb[0].mxu0 %v481
  %v2048 = vpop.f32.mrb[0].mxu0
  %v2049 = vadd.f32 %v2009, %v2048
  %v2050 = vpop.f32.mrb[0].mxu0
  %v2051 = vpop.f32.mrb[0].mxu0
  %v2052 = vpop.f32.mrb[0].mxu0
  %2053 = vdwg.mxu0
  %2054 = vmatprep.subr.bf16.mxu0 0
  %2055 = vmatpush1.bf16.msra.mxu0 %v1442
  %2056 = vmatprep.subr.bf16.mxu0 0
  %2057 = vmatpush1.bf16.msra.mxu0 %v1443
  %2058 = vmatprep.subr.bf16.mxu0 0
  %2059 = vmatpush1.bf16.msra.mxu0 %v1444
  %2060 = vmatprep.subr.bf16.mxu0 0
  %2061 = vmatpush1.bf16.msra.mxu0 %v1445
  %2062 = vmatprep.subr.bf16.mxu0 0
  %2063 = vmatpush1.bf16.msra.mxu0 %v1446
  %2064 = vmatprep.subr.bf16.mxu0 0
  %2065 = vmatpush1.bf16.msra.mxu0 %v1447
  %2066 = vmatprep.subr.bf16.mxu0 0
  %2067 = vmatpush1.bf16.msra.mxu0 %v1448
  %2068 = vmatprep.subr.bf16.mxu0 0
  %2069 = vmatpush1.bf16.msra.mxu0 %v1449
  %2070 = vmatprep.subr.bf16.mxu0 0
  %2071 = vmatpush1.bf16.msra.mxu0 %v1450
  %2072 = vmatprep.subr.bf16.mxu0 0
  %2073 = vmatpush1.bf16.msra.mxu0 %v1451
  %2074 = vmatprep.subr.bf16.mxu0 0
  %2075 = vmatpush1.bf16.msra.mxu0 %v1452
  %2076 = vmatprep.subr.bf16.mxu0 0
  %2077 = vmatpush1.bf16.msra.mxu0 %v1453
  %2078 = vmatprep.subr.bf16.mxu0 0
  %2079 = vmatpush1.bf16.msra.mxu0 %v1454
  %2080 = vmatprep.subr.bf16.mxu0 0
  %2081 = vmatpush1.bf16.msra.mxu0 %v1455
  %2082 = vmatprep.subr.bf16.mxu0 0
  %2083 = vmatpush1.bf16.msra.mxu0 %v1456
  %2084 = vmatprep.subr.bf16.mxu0 0
  %2085 = vmatpush1.bf16.msra.mxu0 %v1457
  %2086 = vmatprep.mubr.bf16.mxu0 %v484
  %2087 = vmatmul.mubr.bf16.gmra.mrb[0].mxu0 %v483
  %v2088 = vpop.f32.mrb[0].mxu0
  %v2089 = vadd.f32 %v2049, %v2088
  %v2090 = vpop.f32.mrb[0].mxu0
  %v2091 = vpop.f32.mrb[0].mxu0
  %v2092 = vpop.f32.mrb[0].mxu0
  %2093 = vdwg.mxu0
  %2094 = vmatprep.subr.bf16.mxu0 0
  %2095 = vmatpush1.bf16.msra.mxu0 %v1458
  %2096 = vmatprep.subr.bf16.mxu0 0
  %2097 = vmatpush1.bf16.msra.mxu0 %v1459
  %2098 = vmatprep.subr.bf16.mxu0 0
  %2099 = vmatpush1.bf16.msra.mxu0 %v1460
  %2100 = vmatprep.subr.bf16.mxu0 0
  %2101 = vmatpush1.bf16.msra.mxu0 %v1461
  %2102 = vmatprep.subr.bf16.mxu0 0
  %2103 = vmatpush1.bf16.msra.mxu0 %v1462
  %2104 = vmatprep.subr.bf16.mxu0 0
  %2105 = vmatpush1.bf16.msra.mxu0 %v1463
  %2106 = vmatprep.subr.bf16.mxu0 0
  %2107 = vmatpush1.bf16.msra.mxu0 %v1464
  %2108 = vmatprep.subr.bf16.mxu0 0
  %2109 = vmatpush1.bf16.msra.mxu0 %v1465
  %2110 = vmatprep.subr.bf16.mxu0 0
  %2111 = vmatpush1.bf16.msra.mxu0 %v1466
  %2112 = vmatprep.subr.bf16.mxu0 0
  %2113 = vmatpush1.bf16.msra.mxu0 %v1467
  %2114 = vmatprep.subr.bf16.mxu0 0
  %2115 = vmatpush1.bf16.msra.mxu0 %v1468
  %2116 = vmatprep.subr.bf16.mxu0 0
  %2117 = vmatpush1.bf16.msra.mxu0 %v1469
  %2118 = vmatprep.subr.bf16.mxu0 0
  %2119 = vmatpush1.bf16.msra.mxu0 %v1470
  %2120 = vmatprep.subr.bf16.mxu0 0
  %2121 = vmatpush1.bf16.msra.mxu0 %v1471
  %2122 = vmatprep.subr.bf16.mxu0 0
  %2123 = vmatpush1.bf16.msra.mxu0 %v1472
  %2124 = vmatprep.subr.bf16.mxu0 0
  %2125 = vmatpush1.bf16.msra.mxu0 %v1473
  %2126 = vmatprep.mubr.bf16.mxu0 %v486
  %2127 = vmatmul.mubr.bf16.gmra.mrb[0].mxu0 %v485
  %v2128 = vpop.f32.mrb[0].mxu0
  %v2129 = vadd.f32 %v2089, %v2128
  %v2130 = vpop.f32.mrb[0].mxu0
  %v2131 = vpop.f32.mrb[0].mxu0
  %v2132 = vpop.f32.mrb[0].mxu0
  %2133 = vdwg.mxu0
  %2134 = vmatprep.subr.bf16.mxu0 0
  %2135 = vmatpush1.bf16.msra.mxu0 %v1474
  %2136 = vmatprep.subr.bf16.mxu0 0
  %2137 = vmatpush1.bf16.msra.mxu0 %v1475
  %2138 = vmatprep.subr.bf16.mxu0 0
  %2139 = vmatpush1.bf16.msra.mxu0 %v1476
  %2140 = vmatprep.subr.bf16.mxu0 0
  %2141 = vmatpush1.bf16.msra.mxu0 %v1477
  %2142 = vmatprep.subr.bf16.mxu0 0
  %2143 = vmatpush1.bf16.msra.mxu0 %v1478
  %2144 = vmatprep.subr.bf16.mxu0 0
  %2145 = vmatpush1.bf16.msra.mxu0 %v1479
  %2146 = vmatprep.subr.bf16.mxu0 0
  %2147 = vmatpush1.bf16.msra.mxu0 %v1480
  %2148 = vmatprep.subr.bf16.mxu0 0
  %2149 = vmatpush1.bf16.msra.mxu0 %v1481
  %2150 = vmatprep.subr.bf16.mxu0 0
  %2151 = vmatpush1.bf16.msra.mxu0 %v1482
  %2152 = vmatprep.subr.bf16.mxu0 0
  %2153 = vmatpush1.bf16.msra.mxu0 %v1483
  %2154 = vmatprep.subr.bf16.mxu0 0
  %2155 = vmatpush1.bf16.msra.mxu0 %v1484
  %2156 = vmatprep.subr.bf16.mxu0 0
  %2157 = vmatpush1.bf16.msra.mxu0 %v1485
  %2158 = vmatprep.subr.bf16.mxu0 0
  %2159 = vmatpush1.bf16.msra.mxu0 %v1486
  %2160 = vmatprep.subr.bf16.mxu0 0
  %2161 = vmatpush1.bf16.msra.mxu0 %v1487
  %2162 = vmatprep.subr.bf16.mxu0 0
  %2163 = vmatpush1.bf16.msra.mxu0 %v1488
  %2164 = vmatprep.subr.bf16.mxu0 0
  %2165 = vmatpush1.bf16.msra.mxu0 %v1489
  %2166 = vmatprep.mubr.bf16.mxu0 %v488
  %2167 = vmatmul.mubr.bf16.gmra.mrb[0].mxu0 %v487
  %v2168 = vpop.f32.mrb[0].mxu0
  %v2169 = vadd.f32 %v2129, %v2168
  %v2170 = vpop.f32.mrb[0].mxu0
  %v2171 = vpop.f32.mrb[0].mxu0
  %v2172 = vpop.f32.mrb[0].mxu0
  %2173 = vdwg.mxu0
  %2174 = vmatprep.subr.bf16.mxu0 0
  %2175 = vmatpush1.bf16.msra.mxu0 %v1490
  %2176 = vmatprep.subr.bf16.mxu0 0
  %2177 = vmatpush1.bf16.msra.mxu0 %v1491
  %2178 = vmatprep.subr.bf16.mxu0 0
  %2179 = vmatpush1.bf16.msra.mxu0 %v1492
  %2180 = vmatprep.subr.bf16.mxu0 0
  %2181 = vmatpush1.bf16.msra.mxu0 %v1493
  %2182 = vmatprep.subr.bf16.mxu0 0
  %2183 = vmatpush1.bf16.msra.mxu0 0
  %2184 = vmatprep.subr.bf16.mxu0 0
  %2185 = vmatpush1.bf16.msra.mxu0 0
  %2186 = vmatprep.subr.bf16.mxu0 0
  %2187 = vmatpush1.bf16.msra.mxu0 0
  %2188 = vmatprep.subr.bf16.mxu0 0
  %2189 = vmatpush1.bf16.msra.mxu0 0
  %2190 = vmatprep.subr.bf16.mxu0 0
  %2191 = vmatpush1.bf16.msra.mxu0 0
  %2192 = vmatprep.subr.bf16.mxu0 0
  %2193 = vmatpush1.bf16.msra.mxu0 0
  %2194 = vmatprep.subr.bf16.mxu0 0
  %2195 = vmatpush1.bf16.msra.mxu0 0
  %2196 = vmatprep.subr.bf16.mxu0 0
  %2197 = vmatpush1.bf16.msra.mxu0 0
  %2198 = vmatprep.subr.bf16.mxu0 0
  %2199 = vmatpush1.bf16.msra.mxu0 0
  %2200 = vmatprep.subr.bf16.mxu0 0
  %2201 = vmatpush1.bf16.msra.mxu0 0
  %2202 = vmatprep.subr.bf16.mxu0 0
  %2203 = vmatpush1.bf16.msra.mxu0 0
  %2204 = vmatprep.subr.bf16.mxu0 0
  %2205 = vmatpush1.bf16.msra.mxu0 0
  %2206 = vmatprep.mubr.bf16.mxu0 0
  %2207 = vmatmul.mubr.bf16.gmra.mrb[0].mxu0 %v1692
  %v2208 = vpop.f32.mrb[0].mxu0
  %v2209 = vadd.f32 %v2169, %v2208
  %v2210 = vpop.f32.mrb[0].mxu0
  %v2211 = vpop.f32.mrb[0].mxu0
  %v2212 = vpop.f32.mrb[0].mxu0
  %2213 = vdwg.mxu0
  %2214 = vst [vmem:[%s3] sm:$0xff] %v2209
  // Predicated region
  $region14: #{conv_encoder_forward.5} parent=0 // pred_check
    _
  $region15: #{conv_encoder_forward.5} parent=0 // pred_check_branch
    %2216 = sbr.rel (0) target = $region17
  $region16: #{conv_encoder_forward.5} parent=0 // pred_region
    _
  $region17: #{conv_encoder_forward.5} parent=0 // pred_fallthru
    _
  // Predicated region
  $region18: #{conv_encoder_forward.5} parent=0 // pred_check
    _
  $region19: #{conv_encoder_forward.5} parent=0 // pred_check_branch
    %2218 = sbr.rel (0) target = $region21
  $region20: #{conv_encoder_forward.5} parent=0 // pred_region
    _
  $region21: #{conv_encoder_forward.5} parent=0 // pred_fallthru
    _

</llo_original>
